<compile_context>
chip_gen: v5e
topology: v5e:2x2
jax: 0.10.0
libtpu: 0.0.40
codegen_flags: <defaults>
</compile_context>

<pallas_src>
import functools

import numpy as np
import jax
import jax.numpy as jnp
from jax.experimental import pallas as pl
from jax.experimental.pallas import tpu as pltpu

NEG_BIAS = -1e12


def _round_up(x, m):
    return (x + m - 1) // m * m


# ----------------------------- glue (plain JAX) ------------------------------
def to_dense_batch(x, batch, size, n_max):
    """Equivalent of torch_geometric.utils.to_dense_batch (zero-padded)."""
    onehot = (batch[:, None] == jnp.arange(size)[None, :]).astype(jnp.int32)
    before = jnp.cumsum(onehot, axis=0) - onehot
    pos = jnp.take_along_axis(before, batch[:, None], axis=1)[:, 0]
    dense = jnp.zeros((size, n_max) + x.shape[1:], x.dtype).at[batch, pos].set(x)
    mask = jnp.zeros((size, n_max), bool).at[batch, pos].set(True)
    return dense, mask


# ------------------------------ Pallas kernel --------------------------------
def _recip(x):
    # EUP approximate reciprocal (divide off the VALU) + one Newton step so the
    # result stays ~f32-accurate for the correctness check.
    r = pl.reciprocal(x, approx=True)
    return r * (2.0 - x * r)


def _make_kernel(fp_ranges):
    G = len(fp_ranges)
    K = 2 * G + 1

    def kernel(x_ref, fp_ref, w_ref, bi_ref, bt_ref, bg_ref,
               out_x_ref, out_c_ref):
        # x_ref : [N, C, B]   node features (graph block on the lane dim)
        # fp_ref: [F, N, B]   0/1 fingerprint membership
        # w_ref : [K, C, 1]   gate weights: rows 0..G-1 = wi_g, G..2G-1 = wt_g, 2G = wg
        x = x_ref[...]                                        # [N, C, B]

        # Batched gate projections p_k[n, b] = <w_k, x[n, :, b]> on the VPU
        # (broadcast-mul + sublane reduce); contraction is only C wide, so the
        # MXU would be >99% padding.
        proj = []
        for k in range(K):                                    # static unroll, K small
            wk = w_ref[k]                                     # [C, 1]
            proj.append(jnp.sum(x * wk[None, :, :], axis=1))  # [N, B]
        s0 = proj[:G]            # inner gates  <wi_g, x>
        t0 = proj[G:2 * G]       # inter gates  <wt_g, x>
        u0 = proj[2 * G]         # global gate  <wg,   x>

        weff_list, contrib_list, scg_list = [], [], []
        for g, (s, e) in enumerate(fp_ranges):                # static unroll over groups
            fp_g = fp_ref[s:e]                                # [L, N, B] (major-axis slice)
            keep = fp_g > 0.5

            # ---- inner attention over atoms (axis N) -------------------------
            score = jnp.where(keep, s0[g] + bi_ref[g], NEG_BIAS)          # fused mask
            m1 = jnp.max(score, axis=1, keepdims=True)                    # [L,1,B]
            e1 = jnp.exp(score - m1)
            sm_inner = e1 * _recip(jnp.sum(e1, axis=1, keepdims=True))    # [L,N,B]
            w_in = sm_inner * fp_g                                        # incl. fp factor

            # ---- inter attention over the bits of this group (axis L) --------
            hit = jnp.sum(fp_g, axis=1, keepdims=True)                    # [L,1,B]
            # <wt_g, x_inner> pushed through the atom sum via t0.
            sc = jnp.sum(w_in * t0[g], axis=1, keepdims=True) + bt_ref[g]
            sc = jnp.where(hit > 0.5, sc, NEG_BIAS)                       # fused mask
            m2 = jnp.max(sc, axis=0, keepdims=True)                       # [1,1,B]
            e2 = jnp.exp(sc - m2)
            sm_inter = e2 * _recip(jnp.sum(e2, axis=0, keepdims=True))    # [L,1,B]

            t_all = sm_inter * sm_inner                                   # [L,N,B]
            contrib_list.append(jnp.sum(t_all, axis=0))                   # [N,B]
            weff_g = jnp.sum(t_all * fp_g, axis=0)                        # [N,B]
            weff_list.append(weff_g)
            # <wg, x_inter_g> pushed through via u0.
            scg_list.append(jnp.sum(weff_g * u0, axis=0, keepdims=True)
                            + bg_ref[0])                                  # [1,B]

        # ---- global attention over fingerprint groups ------------------------
        m3 = functools.reduce(jnp.maximum, scg_list)                      # [1,B]
        e3 = [jnp.exp(sc - m3) for sc in scg_list]
        inv3 = _recip(functools.reduce(lambda a, b: a + b, e3))
        smg = [ei * inv3 for ei in e3]                                    # each [1,B]

        wglob = functools.reduce(lambda a, b: a + b,
                                 [smg[g] * weff_list[g] for g in range(G)])   # [N,B]
        contrib = functools.reduce(lambda a, b: a + b,
                                   [smg[g] * contrib_list[g] for g in range(G)])

        # x_global[c, b] = sum_n wglob[n, b] * x[n, c, b]   (lane-dense stores)
        out_x_ref[...] = jnp.sum(wglob[:, None, :] * x, axis=0)           # [C,B]
        out_c_ref[...] = contrib                                          # [N,B]

    return kernel


def fingerprint_pool_pallas(x_dense, fpT, wi, bi, wt, bt, wg, bg, fp_ranges,
                            b_tile=128):
    """x_dense: [B, N, C] dense node features; fpT: [B, F, N] 0/1 membership."""
    B, N, C = x_dense.shape
    F = fpT.shape[1]
    G = len(fp_ranges)

    # Pad atoms to a sublane multiple and graphs to the lane tile so every kernel
    # array is (8,128)-aligned and every store is lane-dense.  Padded atoms/graphs
    # have x == 0 and fp == 0 and are masked out of every softmax that matters.
    n_pad = max(_round_up(N, 8), 8)
    b_pad = max(_round_up(B, b_tile), b_tile)

    x_p = jnp.zeros((b_pad, n_pad, C), jnp.float32).at[:B, :N, :].set(x_dense)
    fp_p = jnp.zeros((b_pad, F, n_pad), jnp.float32).at[:B, :, :N].set(fpT)

    x_t = jnp.transpose(x_p, (1, 2, 0))                    # [N_pad, C, B_pad]
    fp_t = jnp.transpose(fp_p, (1, 2, 0))                  # [F, N_pad, B_pad]
    w_stack = jnp.concatenate([wi, wt, wg], axis=0)[:, :, None]   # [2G+1, C, 1]

    kernel = _make_kernel(tuple(fp_ranges))
    n_blocks = b_pad // b_tile

    grid_spec = pltpu.PrefetchScalarGridSpec(
        num_scalar_prefetch=0,
        grid=(n_blocks,),
        in_specs=[
            pl.BlockSpec((n_pad, C, b_tile), lambda i: (0, 0, i)),     # x_t
            pl.BlockSpec((F, n_pad, b_tile), lambda i: (0, 0, i)),     # fp_t
            pl.BlockSpec((2 * G + 1, C, 1), lambda i: (0, 0, 0)),      # gate weights (resident)
            pl.BlockSpec(memory_space=pltpu.MemorySpace.SMEM),         # bi
            pl.BlockSpec(memory_space=pltpu.MemorySpace.SMEM),         # bt
            pl.BlockSpec(memory_space=pltpu.MemorySpace.SMEM),         # bg
        ],
        out_specs=[
            pl.BlockSpec((C, b_tile), lambda i: (0, i)),               # x_global^T
            pl.BlockSpec((n_pad, b_tile), lambda i: (0, i)),           # contrib^T
        ],
    )

    xg_t, ct_t = pl.pallas_call(
        kernel,
        out_shape=(jax.ShapeDtypeStruct((C, b_pad), jnp.float32),
                   jax.ShapeDtypeStruct((n_pad, b_pad), jnp.float32)),
        grid_spec=grid_spec,
        compiler_params=pltpu.CompilerParams(
            dimension_semantics=("parallel",)),
    )(x_t, fp_t, w_stack, bi, bt, bg)

    x_global = xg_t.T[:B, :]                               # [B, C]
    contrib = ct_t.T[:B, :N]                               # [B, N]
    return x_global, contrib


# ------------------------- pure-JAX reference (checks) ------------------------
def reference(x_dense, fpT, wi, bi, wt, bt, wg, bg, fp_ranges):
    x_fp = x_dense[:, None, :, :] * fpT[:, :, :, None]                # [B,F,N,C]
    x_inter_list, contrib_inter = [], []
    for g, (s, e) in enumerate(fp_ranges):
        xpf = x_fp[:, s:e]                                            # [B,L,N,C]
        mpf = fpT[:, s:e, :, None] < 1e-5
        score = jnp.einsum('blnc,c->bln', xpf, wi[g])[..., None] + bi[g]
        score = score + mpf * NEG_BIAS
        sm = jax.nn.softmax(score, axis=-2)                           # [B,L,N,1]
        x_inner = (sm * xpf).sum(-2)                                  # [B,L,C]
        mask2 = fpT[:, s:e].sum(-1, keepdims=True) < 1e-5             # [B,L,1]
        sc2 = jnp.einsum('blc,c->bl', x_inner, wt[g])[..., None] + bt[g]
        sc2 = sc2 + mask2 * NEG_BIAS
        sm2 = jax.nn.softmax(sc2, axis=-2)                            # [B,L,1]
        x_inter_list.append((sm2 * x_inner).sum(-2))                  # [B,C]
        contrib_inter.append(sm2[..., None] * sm)                     # [B,L,N,1]
    x_inter = jnp.stack(x_inter_list, axis=-2)                        # [B,G,C]
    scg = jnp.einsum('bgc,c->bg', x_inter, wg[0])[..., None] + bg[0]
    smg = jax.nn.softmax(scg, axis=-2)                                # [B,G,1]
    x_global = (smg * x_inter).sum(-2)
    contrib_global = [ci * smg[:, i, :, None, None]
                      for i, ci in enumerate(contrib_inter)]
    contrib = jnp.concatenate(contrib_global, axis=1).sum(axis=1)[..., 0]  # [B,N]
    return x_global, contrib


# ----------------------------------- main -------------------------------------
if __name__ == "__main__":
    B = 2
    C = 32                      # in_channel
    hidden_channel = 64         # present in __init__ but unused by forward
    fp_length = [6, 10]
    counts = [5, 6]             # atoms per graph
    num_atom = sum(counts)
    N_max = max(counts)
    F_raw = sum(fp_length)
    fp_num = len(fp_length) + 1  # atoms_repr=True

    key = jax.random.PRNGKey(0)
    kx, kfp, k1, k2, k3, k4, k5, k6 = jax.random.split(key, 8)
    x = jax.random.normal(kx, (num_atom, C), jnp.float32)
    fp_bits = (jax.random.uniform(kfp, (num_atom, F_raw)) < 0.4).astype(jnp.int32)
    batch = jnp.asarray(np.repeat(np.arange(B), counts), jnp.int32)

    # deterministic "Linear" parameters (gate_inner / gate_inter / gate_global)
    wi = jax.random.normal(k1, (fp_num, C), jnp.float32) * 0.2
    bi = jax.random.normal(k2, (fp_num,), jnp.float32) * 0.1
    wt = jax.random.normal(k3, (fp_num, C), jnp.float32) * 0.2
    bt = jax.random.normal(k4, (fp_num,), jnp.float32) * 0.1
    wg = jax.random.normal(k5, (1, C), jnp.float32) * 0.2
    bg = jax.random.normal(k6, (1,), jnp.float32) * 0.1

    # atoms_repr=True: prepend all-ones "fingerprint" column and length 1
    fp_full = jnp.concatenate(
        [jnp.ones((num_atom, 1), jnp.float32), fp_bits.astype(jnp.float32)], axis=-1)
    fp_len_full = [1] + list(fp_length)
    fp_ranges, start = [], 0
    for L in fp_len_full:
        fp_ranges.append((start, start + L))
        start += L

    x_dense, _ = to_dense_batch(x, batch, B, N_max)                 # [B, N, C]
    fp_dense, _ = to_dense_batch(fp_full, batch, B, N_max)          # [B, N, F]
    fpT = jnp.transpose(fp_dense, (0, 2, 1))                        # [B, F, N]

    x_global, contrib = fingerprint_pool_pallas(
        x_dense, fpT, wi, bi, wt, bt, wg, bg, fp_ranges)
    jax.block_until_ready(x_global)
    jax.block_until_ready(contrib)

    x_global_ref, contrib_ref = reference(
        x_dense, fpT, wi, bi, wt, bt, wg, bg, fp_ranges)
    np.testing.assert_allclose(np.asarray(x_global), np.asarray(x_global_ref),
                               rtol=1e-3, atol=1e-3)
    np.testing.assert_allclose(np.asarray(contrib), np.asarray(contrib_ref),
                               rtol=1e-3, atol=1e-3)
    print("KERNEL_OK")
</pallas_src>

<mosaic_0001>
module attributes {stable_mosaic.version = 11 : i64} {
  func.func @kernel(%arg0: i32, %arg1: memref<8x32x128xf32, #tpu.memory_space<vmem>>, %arg2: memref<17x8x128xf32, #tpu.memory_space<vmem>>, %arg3: memref<7x32x1xf32, #tpu.memory_space<vmem>>, %arg4: memref<3xf32, #tpu.memory_space<smem>>, %arg5: memref<3xf32, #tpu.memory_space<smem>>, %arg6: memref<1xf32, #tpu.memory_space<smem>>, %arg7: memref<32x128xf32, #tpu.memory_space<vmem>>, %arg8: memref<8x128xf32, #tpu.memory_space<vmem>>) attributes {dimension_semantics = [#tpu.dimension_semantics<parallel>], iteration_bounds = array<i64: 1>, scalar_prefetch = 0 : i64, scratch_operands = 0 : i64, tpu.core_type = #tpu.core_type<tc>, window_params = [{transform_indices = @transform_0, window_bounds = array<i64: 8, 32, 128>}, {transform_indices = @transform_1, window_bounds = array<i64: 17, 8, 128>}, {pipeline_mode = #tpu.pipeline_mode<synchronous>, transform_indices = @transform_2, window_bounds = array<i64: 7, 32, 1>}, {transform_indices = @transform_3, window_bounds = array<i64: 3>}, {transform_indices = @transform_4, window_bounds = array<i64: 3>}, {transform_indices = @transform_5, window_bounds = array<i64: 1>}, {transform_indices = @transform_6, window_bounds = array<i64: 32, 128>}, {transform_indices = @transform_7, window_bounds = array<i64: 8, 128>}]} {
    %c0 = arith.constant 0 : index
    %c0_0 = arith.constant 0 : index
    %c0_1 = arith.constant 0 : index
    %0 = vector.load %arg1[%c0, %c0_0, %c0_1] : memref<8x32x128xf32, #tpu.memory_space<vmem>>, vector<8x32x128xf32>
    %c0_2 = arith.constant 0 : index
    %c0_3 = arith.constant 0 : index
    %c0_4 = arith.constant 0 : index
    %1 = vector.load %arg3[%c0_2, %c0_3, %c0_4] : memref<7x32x1xf32, #tpu.memory_space<vmem>>, vector<1x32x1xf32>
    %2 = vector.shape_cast %1 : vector<1x32x1xf32> to vector<32x1xf32>
    %3 = vector.shape_cast %2 : vector<32x1xf32> to vector<1x32x1xf32>
    %4 = vector.broadcast %3 : vector<1x32x1xf32> to vector<8x32x128xf32>
    %5 = arith.mulf %0, %4 : vector<8x32x128xf32>
    %cst = arith.constant dense<0.000000e+00> : vector<8x128xf32>
    %6 = vector.multi_reduction <add>, %5, %cst [1] : vector<8x32x128xf32> to vector<8x128xf32>
    %c1 = arith.constant 1 : index
    %c0_5 = arith.constant 0 : index
    %c0_6 = arith.constant 0 : index
    %7 = vector.load %arg3[%c1, %c0_5, %c0_6] : memref<7x32x1xf32, #tpu.memory_space<vmem>>, vector<1x32x1xf32>
    %8 = vector.shape_cast %7 : vector<1x32x1xf32> to vector<32x1xf32>
    %9 = vector.shape_cast %8 : vector<32x1xf32> to vector<1x32x1xf32>
    %10 = vector.broadcast %9 : vector<1x32x1xf32> to vector<8x32x128xf32>
    %11 = arith.mulf %0, %10 : vector<8x32x128xf32>
    %cst_7 = arith.constant dense<0.000000e+00> : vector<8x128xf32>
    %12 = vector.multi_reduction <add>, %11, %cst_7 [1] : vector<8x32x128xf32> to vector<8x128xf32>
    %c2 = arith.constant 2 : index
    %c0_8 = arith.constant 0 : index
    %c0_9 = arith.constant 0 : index
    %13 = vector.load %arg3[%c2, %c0_8, %c0_9] : memref<7x32x1xf32, #tpu.memory_space<vmem>>, vector<1x32x1xf32>
    %14 = vector.shape_cast %13 : vector<1x32x1xf32> to vector<32x1xf32>
    %15 = vector.shape_cast %14 : vector<32x1xf32> to vector<1x32x1xf32>
    %16 = vector.broadcast %15 : vector<1x32x1xf32> to vector<8x32x128xf32>
    %17 = arith.mulf %0, %16 : vector<8x32x128xf32>
    %cst_10 = arith.constant dense<0.000000e+00> : vector<8x128xf32>
    %18 = vector.multi_reduction <add>, %17, %cst_10 [1] : vector<8x32x128xf32> to vector<8x128xf32>
    %c3 = arith.constant 3 : index
    %c0_11 = arith.constant 0 : index
    %c0_12 = arith.constant 0 : index
    %19 = vector.load %arg3[%c3, %c0_11, %c0_12] : memref<7x32x1xf32, #tpu.memory_space<vmem>>, vector<1x32x1xf32>
    %20 = vector.shape_cast %19 : vector<1x32x1xf32> to vector<32x1xf32>
    %21 = vector.shape_cast %20 : vector<32x1xf32> to vector<1x32x1xf32>
    %22 = vector.broadcast %21 : vector<1x32x1xf32> to vector<8x32x128xf32>
    %23 = arith.mulf %0, %22 : vector<8x32x128xf32>
    %cst_13 = arith.constant dense<0.000000e+00> : vector<8x128xf32>
    %24 = vector.multi_reduction <add>, %23, %cst_13 [1] : vector<8x32x128xf32> to vector<8x128xf32>
    %c4 = arith.constant 4 : index
    %c0_14 = arith.constant 0 : index
    %c0_15 = arith.constant 0 : index
    %25 = vector.load %arg3[%c4, %c0_14, %c0_15] : memref<7x32x1xf32, #tpu.memory_space<vmem>>, vector<1x32x1xf32>
    %26 = vector.shape_cast %25 : vector<1x32x1xf32> to vector<32x1xf32>
    %27 = vector.shape_cast %26 : vector<32x1xf32> to vector<1x32x1xf32>
    %28 = vector.broadcast %27 : vector<1x32x1xf32> to vector<8x32x128xf32>
    %29 = arith.mulf %0, %28 : vector<8x32x128xf32>
    %cst_16 = arith.constant dense<0.000000e+00> : vector<8x128xf32>
    %30 = vector.multi_reduction <add>, %29, %cst_16 [1] : vector<8x32x128xf32> to vector<8x128xf32>
    %c5 = arith.constant 5 : index
    %c0_17 = arith.constant 0 : index
    %c0_18 = arith.constant 0 : index
    %31 = vector.load %arg3[%c5, %c0_17, %c0_18] : memref<7x32x1xf32, #tpu.memory_space<vmem>>, vector<1x32x1xf32>
    %32 = vector.shape_cast %31 : vector<1x32x1xf32> to vector<32x1xf32>
    %33 = vector.shape_cast %32 : vector<32x1xf32> to vector<1x32x1xf32>
    %34 = vector.broadcast %33 : vector<1x32x1xf32> to vector<8x32x128xf32>
    %35 = arith.mulf %0, %34 : vector<8x32x128xf32>
    %cst_19 = arith.constant dense<0.000000e+00> : vector<8x128xf32>
    %36 = vector.multi_reduction <add>, %35, %cst_19 [1] : vector<8x32x128xf32> to vector<8x128xf32>
    %c6 = arith.constant 6 : index
    %c0_20 = arith.constant 0 : index
    %c0_21 = arith.constant 0 : index
    %37 = vector.load %arg3[%c6, %c0_20, %c0_21] : memref<7x32x1xf32, #tpu.memory_space<vmem>>, vector<1x32x1xf32>
    %38 = vector.shape_cast %37 : vector<1x32x1xf32> to vector<32x1xf32>
    %39 = vector.shape_cast %38 : vector<32x1xf32> to vector<1x32x1xf32>
    %40 = vector.broadcast %39 : vector<1x32x1xf32> to vector<8x32x128xf32>
    %41 = arith.mulf %0, %40 : vector<8x32x128xf32>
    %cst_22 = arith.constant dense<0.000000e+00> : vector<8x128xf32>
    %42 = vector.multi_reduction <add>, %41, %cst_22 [1] : vector<8x32x128xf32> to vector<8x128xf32>
    %c0_23 = arith.constant 0 : index
    %c0_24 = arith.constant 0 : index
    %c0_25 = arith.constant 0 : index
    %43 = vector.load %arg2[%c0_23, %c0_24, %c0_25] : memref<17x8x128xf32, #tpu.memory_space<vmem>>, vector<1x8x128xf32>
    %cst_26 = arith.constant 5.000000e-01 : f32
    %44 = vector.broadcast %cst_26 : f32 to vector<1x8x128xf32>
    %45 = arith.cmpf ogt, %43, %44 : vector<1x8x128xf32>
    %c0_27 = arith.constant 0 : index
    %46 = memref.load %arg4[%c0_27] : memref<3xf32, #tpu.memory_space<smem>>
    %47 = vector.broadcast %46 : f32 to vector<8x128xf32>
    %48 = arith.addf %6, %47 : vector<8x128xf32>
    %cst_28 = arith.constant -9.99999995E+11 : f32
    %49 = vector.shape_cast %48 : vector<8x128xf32> to vector<1x8x128xf32>
    %50 = vector.broadcast %cst_28 : f32 to vector<1x8x128xf32>
    %51 = arith.select %45, %49, %50 : vector<1x8x128xi1>, vector<1x8x128xf32>
    %cst_29 = arith.constant dense<0xFF800000> : vector<1x128xf32>
    %52 = vector.multi_reduction <maximumf>, %51, %cst_29 [1] : vector<1x8x128xf32> to vector<1x128xf32>
    %53 = vector.shape_cast %52 : vector<1x128xf32> to vector<1x1x128xf32>
    %54 = vector.broadcast %53 : vector<1x1x128xf32> to vector<1x8x128xf32>
    %55 = arith.subf %51, %54 : vector<1x8x128xf32>
    %56 = math.exp %55 : vector<1x8x128xf32>
    %cst_30 = arith.constant dense<0.000000e+00> : vector<1x128xf32>
    %57 = vector.multi_reduction <add>, %56, %cst_30 [1] : vector<1x8x128xf32> to vector<1x128xf32>
    %58 = vector.shape_cast %57 : vector<1x128xf32> to vector<1x1x128xf32>
    %59 = tpu.reciprocal %58 {approx = true} : vector<1x1x128xf32> -> vector<1x1x128xf32>
    %60 = arith.mulf %58, %59 : vector<1x1x128xf32>
    %cst_31 = arith.constant 2.000000e+00 : f32
    %61 = vector.broadcast %cst_31 : f32 to vector<1x1x128xf32>
    %62 = arith.subf %61, %60 : vector<1x1x128xf32>
    %63 = arith.mulf %59, %62 : vector<1x1x128xf32>
    %64 = vector.broadcast %63 : vector<1x1x128xf32> to vector<1x8x128xf32>
    %65 = arith.mulf %56, %64 : vector<1x8x128xf32>
    %66 = arith.mulf %65, %43 : vector<1x8x128xf32>
    %cst_32 = arith.constant dense<0.000000e+00> : vector<1x128xf32>
    %67 = vector.multi_reduction <add>, %43, %cst_32 [1] : vector<1x8x128xf32> to vector<1x128xf32>
    %68 = vector.shape_cast %67 : vector<1x128xf32> to vector<1x1x128xf32>
    %69 = vector.shape_cast %24 : vector<8x128xf32> to vector<1x8x128xf32>
    %70 = arith.mulf %66, %69 : vector<1x8x128xf32>
    %cst_33 = arith.constant dense<0.000000e+00> : vector<1x128xf32>
    %71 = vector.multi_reduction <add>, %70, %cst_33 [1] : vector<1x8x128xf32> to vector<1x128xf32>
    %72 = vector.shape_cast %71 : vector<1x128xf32> to vector<1x1x128xf32>
    %c0_34 = arith.constant 0 : index
    %73 = memref.load %arg5[%c0_34] : memref<3xf32, #tpu.memory_space<smem>>
    %74 = vector.broadcast %73 : f32 to vector<1x1x128xf32>
    %75 = arith.addf %72, %74 : vector<1x1x128xf32>
    %cst_35 = arith.constant 5.000000e-01 : f32
    %76 = vector.broadcast %cst_35 : f32 to vector<1x1x128xf32>
    %77 = arith.cmpf ogt, %68, %76 : vector<1x1x128xf32>
    %cst_36 = arith.constant -9.99999995E+11 : f32
    %78 = vector.broadcast %cst_36 : f32 to vector<1x1x128xf32>
    %79 = arith.select %77, %75, %78 : vector<1x1x128xi1>, vector<1x1x128xf32>
    %cst_37 = arith.constant dense<0xFF800000> : vector<1x128xf32>
    %80 = vector.multi_reduction <maximumf>, %79, %cst_37 [0] : vector<1x1x128xf32> to vector<1x128xf32>
    %81 = vector.shape_cast %80 : vector<1x128xf32> to vector<1x1x128xf32>
    %82 = arith.subf %79, %81 : vector<1x1x128xf32>
    %83 = math.exp %82 : vector<1x1x128xf32>
    %cst_38 = arith.constant dense<0.000000e+00> : vector<1x128xf32>
    %84 = vector.multi_reduction <add>, %83, %cst_38 [0] : vector<1x1x128xf32> to vector<1x128xf32>
    %85 = vector.shape_cast %84 : vector<1x128xf32> to vector<1x1x128xf32>
    %86 = tpu.reciprocal %85 {approx = true} : vector<1x1x128xf32> -> vector<1x1x128xf32>
    %87 = arith.mulf %85, %86 : vector<1x1x128xf32>
    %cst_39 = arith.constant 2.000000e+00 : f32
    %88 = vector.broadcast %cst_39 : f32 to vector<1x1x128xf32>
    %89 = arith.subf %88, %87 : vector<1x1x128xf32>
    %90 = arith.mulf %86, %89 : vector<1x1x128xf32>
    %91 = arith.mulf %83, %90 : vector<1x1x128xf32>
    %92 = vector.broadcast %91 : vector<1x1x128xf32> to vector<1x8x128xf32>
    %93 = arith.mulf %92, %65 : vector<1x8x128xf32>
    %cst_40 = arith.constant dense<0.000000e+00> : vector<8x128xf32>
    %94 = vector.multi_reduction <add>, %93, %cst_40 [0] : vector<1x8x128xf32> to vector<8x128xf32>
    %95 = arith.mulf %93, %43 : vector<1x8x128xf32>
    %cst_41 = arith.constant dense<0.000000e+00> : vector<8x128xf32>
    %96 = vector.multi_reduction <add>, %95, %cst_41 [0] : vector<1x8x128xf32> to vector<8x128xf32>
    %97 = arith.mulf %96, %42 : vector<8x128xf32>
    %cst_42 = arith.constant dense<0.000000e+00> : vector<128xf32>
    %98 = vector.multi_reduction <add>, %97, %cst_42 [0] : vector<8x128xf32> to vector<128xf32>
    %99 = vector.shape_cast %98 : vector<128xf32> to vector<1x128xf32>
    %c0_43 = arith.constant 0 : index
    %100 = memref.load %arg6[%c0_43] : memref<1xf32, #tpu.memory_space<smem>>
    %101 = vector.broadcast %100 : f32 to vector<1x128xf32>
    %102 = arith.addf %99, %101 : vector<1x128xf32>
    %c1_44 = arith.constant 1 : index
    %c0_45 = arith.constant 0 : index
    %c0_46 = arith.constant 0 : index
    %103 = vector.load %arg2[%c1_44, %c0_45, %c0_46] : memref<17x8x128xf32, #tpu.memory_space<vmem>>, vector<6x8x128xf32>
    %cst_47 = arith.constant 5.000000e-01 : f32
    %104 = vector.broadcast %cst_47 : f32 to vector<6x8x128xf32>
    %105 = arith.cmpf ogt, %103, %104 : vector<6x8x128xf32>
    %c1_48 = arith.constant 1 : index
    %106 = memref.load %arg4[%c1_48] : memref<3xf32, #tpu.memory_space<smem>>
    %107 = vector.broadcast %106 : f32 to vector<8x128xf32>
    %108 = arith.addf %12, %107 : vector<8x128xf32>
    %cst_49 = arith.constant -9.99999995E+11 : f32
    %109 = vector.shape_cast %108 : vector<8x128xf32> to vector<1x8x128xf32>
    %110 = vector.broadcast %109 : vector<1x8x128xf32> to vector<6x8x128xf32>
    %111 = vector.broadcast %cst_49 : f32 to vector<6x8x128xf32>
    %112 = arith.select %105, %110, %111 : vector<6x8x128xi1>, vector<6x8x128xf32>
    %cst_50 = arith.constant dense<0xFF800000> : vector<6x128xf32>
    %113 = vector.multi_reduction <maximumf>, %112, %cst_50 [1] : vector<6x8x128xf32> to vector<6x128xf32>
    %114 = vector.shape_cast %113 : vector<6x128xf32> to vector<6x1x128xf32>
    %115 = vector.broadcast %114 : vector<6x1x128xf32> to vector<6x8x128xf32>
    %116 = arith.subf %112, %115 : vector<6x8x128xf32>
    %117 = math.exp %116 : vector<6x8x128xf32>
    %cst_51 = arith.constant dense<0.000000e+00> : vector<6x128xf32>
    %118 = vector.multi_reduction <add>, %117, %cst_51 [1] : vector<6x8x128xf32> to vector<6x128xf32>
    %119 = vector.shape_cast %118 : vector<6x128xf32> to vector<6x1x128xf32>
    %120 = tpu.reciprocal %119 {approx = true} : vector<6x1x128xf32> -> vector<6x1x128xf32>
    %121 = arith.mulf %119, %120 : vector<6x1x128xf32>
    %cst_52 = arith.constant 2.000000e+00 : f32
    %122 = vector.broadcast %cst_52 : f32 to vector<6x1x128xf32>
    %123 = arith.subf %122, %121 : vector<6x1x128xf32>
    %124 = arith.mulf %120, %123 : vector<6x1x128xf32>
    %125 = vector.broadcast %124 : vector<6x1x128xf32> to vector<6x8x128xf32>
    %126 = arith.mulf %117, %125 : vector<6x8x128xf32>
    %127 = arith.mulf %126, %103 : vector<6x8x128xf32>
    %cst_53 = arith.constant dense<0.000000e+00> : vector<6x128xf32>
    %128 = vector.multi_reduction <add>, %103, %cst_53 [1] : vector<6x8x128xf32> to vector<6x128xf32>
    %129 = vector.shape_cast %128 : vector<6x128xf32> to vector<6x1x128xf32>
    %130 = vector.shape_cast %30 : vector<8x128xf32> to vector<1x8x128xf32>
    %131 = vector.broadcast %130 : vector<1x8x128xf32> to vector<6x8x128xf32>
    %132 = arith.mulf %127, %131 : vector<6x8x128xf32>
    %cst_54 = arith.constant dense<0.000000e+00> : vector<6x128xf32>
    %133 = vector.multi_reduction <add>, %132, %cst_54 [1] : vector<6x8x128xf32> to vector<6x128xf32>
    %134 = vector.shape_cast %133 : vector<6x128xf32> to vector<6x1x128xf32>
    %c1_55 = arith.constant 1 : index
    %135 = memref.load %arg5[%c1_55] : memref<3xf32, #tpu.memory_space<smem>>
    %136 = vector.broadcast %135 : f32 to vector<6x1x128xf32>
    %137 = arith.addf %134, %136 : vector<6x1x128xf32>
    %cst_56 = arith.constant 5.000000e-01 : f32
    %138 = vector.broadcast %cst_56 : f32 to vector<6x1x128xf32>
    %139 = arith.cmpf ogt, %129, %138 : vector<6x1x128xf32>
    %cst_57 = arith.constant -9.99999995E+11 : f32
    %140 = vector.broadcast %cst_57 : f32 to vector<6x1x128xf32>
    %141 = arith.select %139, %137, %140 : vector<6x1x128xi1>, vector<6x1x128xf32>
    %cst_58 = arith.constant dense<0xFF800000> : vector<1x128xf32>
    %142 = vector.multi_reduction <maximumf>, %141, %cst_58 [0] : vector<6x1x128xf32> to vector<1x128xf32>
    %143 = vector.shape_cast %142 : vector<1x128xf32> to vector<1x1x128xf32>
    %144 = vector.broadcast %143 : vector<1x1x128xf32> to vector<6x1x128xf32>
    %145 = arith.subf %141, %144 : vector<6x1x128xf32>
    %146 = math.exp %145 : vector<6x1x128xf32>
    %cst_59 = arith.constant dense<0.000000e+00> : vector<1x128xf32>
    %147 = vector.multi_reduction <add>, %146, %cst_59 [0] : vector<6x1x128xf32> to vector<1x128xf32>
    %148 = vector.shape_cast %147 : vector<1x128xf32> to vector<1x1x128xf32>
    %149 = tpu.reciprocal %148 {approx = true} : vector<1x1x128xf32> -> vector<1x1x128xf32>
    %150 = arith.mulf %148, %149 : vector<1x1x128xf32>
    %cst_60 = arith.constant 2.000000e+00 : f32
    %151 = vector.broadcast %cst_60 : f32 to vector<1x1x128xf32>
    %152 = arith.subf %151, %150 : vector<1x1x128xf32>
    %153 = arith.mulf %149, %152 : vector<1x1x128xf32>
    %154 = vector.broadcast %153 : vector<1x1x128xf32> to vector<6x1x128xf32>
    %155 = arith.mulf %146, %154 : vector<6x1x128xf32>
    %156 = vector.broadcast %155 : vector<6x1x128xf32> to vector<6x8x128xf32>
    %157 = arith.mulf %156, %126 : vector<6x8x128xf32>
    %cst_61 = arith.constant dense<0.000000e+00> : vector<8x128xf32>
    %158 = vector.multi_reduction <add>, %157, %cst_61 [0] : vector<6x8x128xf32> to vector<8x128xf32>
    %159 = arith.mulf %157, %103 : vector<6x8x128xf32>
    %cst_62 = arith.constant dense<0.000000e+00> : vector<8x128xf32>
    %160 = vector.multi_reduction <add>, %159, %cst_62 [0] : vector<6x8x128xf32> to vector<8x128xf32>
    %161 = arith.mulf %160, %42 : vector<8x128xf32>
    %cst_63 = arith.constant dense<0.000000e+00> : vector<128xf32>
    %162 = vector.multi_reduction <add>, %161, %cst_63 [0] : vector<8x128xf32> to vector<128xf32>
    %163 = vector.shape_cast %162 : vector<128xf32> to vector<1x128xf32>
    %c0_64 = arith.constant 0 : index
    %164 = memref.load %arg6[%c0_64] : memref<1xf32, #tpu.memory_space<smem>>
    %165 = vector.broadcast %164 : f32 to vector<1x128xf32>
    %166 = arith.addf %163, %165 : vector<1x128xf32>
    %c7 = arith.constant 7 : index
    %c0_65 = arith.constant 0 : index
    %c0_66 = arith.constant 0 : index
    %167 = vector.load %arg2[%c7, %c0_65, %c0_66] : memref<17x8x128xf32, #tpu.memory_space<vmem>>, vector<10x8x128xf32>
    %cst_67 = arith.constant 5.000000e-01 : f32
    %168 = vector.broadcast %cst_67 : f32 to vector<10x8x128xf32>
    %169 = arith.cmpf ogt, %167, %168 : vector<10x8x128xf32>
    %c2_68 = arith.constant 2 : index
    %170 = memref.load %arg4[%c2_68] : memref<3xf32, #tpu.memory_space<smem>>
    %171 = vector.broadcast %170 : f32 to vector<8x128xf32>
    %172 = arith.addf %18, %171 : vector<8x128xf32>
    %cst_69 = arith.constant -9.99999995E+11 : f32
    %173 = vector.shape_cast %172 : vector<8x128xf32> to vector<1x8x128xf32>
    %174 = vector.broadcast %173 : vector<1x8x128xf32> to vector<10x8x128xf32>
    %175 = vector.broadcast %cst_69 : f32 to vector<10x8x128xf32>
    %176 = arith.select %169, %174, %175 : vector<10x8x128xi1>, vector<10x8x128xf32>
    %cst_70 = arith.constant dense<0xFF800000> : vector<10x128xf32>
    %177 = vector.multi_reduction <maximumf>, %176, %cst_70 [1] : vector<10x8x128xf32> to vector<10x128xf32>
    %178 = vector.shape_cast %177 : vector<10x128xf32> to vector<10x1x128xf32>
    %179 = vector.broadcast %178 : vector<10x1x128xf32> to vector<10x8x128xf32>
    %180 = arith.subf %176, %179 : vector<10x8x128xf32>
    %181 = math.exp %180 : vector<10x8x128xf32>
    %cst_71 = arith.constant dense<0.000000e+00> : vector<10x128xf32>
    %182 = vector.multi_reduction <add>, %181, %cst_71 [1] : vector<10x8x128xf32> to vector<10x128xf32>
    %183 = vector.shape_cast %182 : vector<10x128xf32> to vector<10x1x128xf32>
    %184 = tpu.reciprocal %183 {approx = true} : vector<10x1x128xf32> -> vector<10x1x128xf32>
    %185 = arith.mulf %183, %184 : vector<10x1x128xf32>
    %cst_72 = arith.constant 2.000000e+00 : f32
    %186 = vector.broadcast %cst_72 : f32 to vector<10x1x128xf32>
    %187 = arith.subf %186, %185 : vector<10x1x128xf32>
    %188 = arith.mulf %184, %187 : vector<10x1x128xf32>
    %189 = vector.broadcast %188 : vector<10x1x128xf32> to vector<10x8x128xf32>
    %190 = arith.mulf %181, %189 : vector<10x8x128xf32>
    %191 = arith.mulf %190, %167 : vector<10x8x128xf32>
    %cst_73 = arith.constant dense<0.000000e+00> : vector<10x128xf32>
    %192 = vector.multi_reduction <add>, %167, %cst_73 [1] : vector<10x8x128xf32> to vector<10x128xf32>
    %193 = vector.shape_cast %192 : vector<10x128xf32> to vector<10x1x128xf32>
    %194 = vector.shape_cast %36 : vector<8x128xf32> to vector<1x8x128xf32>
    %195 = vector.broadcast %194 : vector<1x8x128xf32> to vector<10x8x128xf32>
    %196 = arith.mulf %191, %195 : vector<10x8x128xf32>
    %cst_74 = arith.constant dense<0.000000e+00> : vector<10x128xf32>
    %197 = vector.multi_reduction <add>, %196, %cst_74 [1] : vector<10x8x128xf32> to vector<10x128xf32>
    %198 = vector.shape_cast %197 : vector<10x128xf32> to vector<10x1x128xf32>
    %c2_75 = arith.constant 2 : index
    %199 = memref.load %arg5[%c2_75] : memref<3xf32, #tpu.memory_space<smem>>
    %200 = vector.broadcast %199 : f32 to vector<10x1x128xf32>
    %201 = arith.addf %198, %200 : vector<10x1x128xf32>
    %cst_76 = arith.constant 5.000000e-01 : f32
    %202 = vector.broadcast %cst_76 : f32 to vector<10x1x128xf32>
    %203 = arith.cmpf ogt, %193, %202 : vector<10x1x128xf32>
    %cst_77 = arith.constant -9.99999995E+11 : f32
    %204 = vector.broadcast %cst_77 : f32 to vector<10x1x128xf32>
    %205 = arith.select %203, %201, %204 : vector<10x1x128xi1>, vector<10x1x128xf32>
    %cst_78 = arith.constant dense<0xFF800000> : vector<1x128xf32>
    %206 = vector.multi_reduction <maximumf>, %205, %cst_78 [0] : vector<10x1x128xf32> to vector<1x128xf32>
    %207 = vector.shape_cast %206 : vector<1x128xf32> to vector<1x1x128xf32>
    %208 = vector.broadcast %207 : vector<1x1x128xf32> to vector<10x1x128xf32>
    %209 = arith.subf %205, %208 : vector<10x1x128xf32>
    %210 = math.exp %209 : vector<10x1x128xf32>
    %cst_79 = arith.constant dense<0.000000e+00> : vector<1x128xf32>
    %211 = vector.multi_reduction <add>, %210, %cst_79 [0] : vector<10x1x128xf32> to vector<1x128xf32>
    %212 = vector.shape_cast %211 : vector<1x128xf32> to vector<1x1x128xf32>
    %213 = tpu.reciprocal %212 {approx = true} : vector<1x1x128xf32> -> vector<1x1x128xf32>
    %214 = arith.mulf %212, %213 : vector<1x1x128xf32>
    %cst_80 = arith.constant 2.000000e+00 : f32
    %215 = vector.broadcast %cst_80 : f32 to vector<1x1x128xf32>
    %216 = arith.subf %215, %214 : vector<1x1x128xf32>
    %217 = arith.mulf %213, %216 : vector<1x1x128xf32>
    %218 = vector.broadcast %217 : vector<1x1x128xf32> to vector<10x1x128xf32>
    %219 = arith.mulf %210, %218 : vector<10x1x128xf32>
    %220 = vector.broadcast %219 : vector<10x1x128xf32> to vector<10x8x128xf32>
    %221 = arith.mulf %220, %190 : vector<10x8x128xf32>
    %cst_81 = arith.constant dense<0.000000e+00> : vector<8x128xf32>
    %222 = vector.multi_reduction <add>, %221, %cst_81 [0] : vector<10x8x128xf32> to vector<8x128xf32>
    %223 = arith.mulf %221, %167 : vector<10x8x128xf32>
    %cst_82 = arith.constant dense<0.000000e+00> : vector<8x128xf32>
    %224 = vector.multi_reduction <add>, %223, %cst_82 [0] : vector<10x8x128xf32> to vector<8x128xf32>
    %225 = arith.mulf %224, %42 : vector<8x128xf32>
    %cst_83 = arith.constant dense<0.000000e+00> : vector<128xf32>
    %226 = vector.multi_reduction <add>, %225, %cst_83 [0] : vector<8x128xf32> to vector<128xf32>
    %227 = vector.shape_cast %226 : vector<128xf32> to vector<1x128xf32>
    %c0_84 = arith.constant 0 : index
    %228 = memref.load %arg6[%c0_84] : memref<1xf32, #tpu.memory_space<smem>>
    %229 = vector.broadcast %228 : f32 to vector<1x128xf32>
    %230 = arith.addf %227, %229 : vector<1x128xf32>
    %231 = arith.maximumf %102, %166 : vector<1x128xf32>
    %232 = arith.maximumf %231, %230 : vector<1x128xf32>
    %233 = arith.subf %102, %232 : vector<1x128xf32>
    %234 = math.exp %233 : vector<1x128xf32>
    %235 = arith.subf %166, %232 : vector<1x128xf32>
    %236 = math.exp %235 : vector<1x128xf32>
    %237 = arith.subf %230, %232 : vector<1x128xf32>
    %238 = math.exp %237 : vector<1x128xf32>
    %239 = arith.addf %234, %236 : vector<1x128xf32>
    %240 = arith.addf %239, %238 : vector<1x128xf32>
    %241 = tpu.reciprocal %240 {approx = true} : vector<1x128xf32> -> vector<1x128xf32>
    %242 = arith.mulf %240, %241 : vector<1x128xf32>
    %cst_85 = arith.constant 2.000000e+00 : f32
    %243 = vector.broadcast %cst_85 : f32 to vector<1x128xf32>
    %244 = arith.subf %243, %242 : vector<1x128xf32>
    %245 = arith.mulf %241, %244 : vector<1x128xf32>
    %246 = arith.mulf %234, %245 : vector<1x128xf32>
    %247 = arith.mulf %236, %245 : vector<1x128xf32>
    %248 = arith.mulf %238, %245 : vector<1x128xf32>
    %249 = vector.broadcast %246 : vector<1x128xf32> to vector<8x128xf32>
    %250 = arith.mulf %249, %96 : vector<8x128xf32>
    %251 = vector.broadcast %247 : vector<1x128xf32> to vector<8x128xf32>
    %252 = arith.mulf %251, %160 : vector<8x128xf32>
    %253 = vector.broadcast %248 : vector<1x128xf32> to vector<8x128xf32>
    %254 = arith.mulf %253, %224 : vector<8x128xf32>
    %255 = arith.addf %250, %252 : vector<8x128xf32>
    %256 = arith.addf %255, %254 : vector<8x128xf32>
    %257 = vector.broadcast %246 : vector<1x128xf32> to vector<8x128xf32>
    %258 = arith.mulf %257, %94 : vector<8x128xf32>
    %259 = vector.broadcast %247 : vector<1x128xf32> to vector<8x128xf32>
    %260 = arith.mulf %259, %158 : vector<8x128xf32>
    %261 = vector.broadcast %248 : vector<1x128xf32> to vector<8x128xf32>
    %262 = arith.mulf %261, %222 : vector<8x128xf32>
    %263 = arith.addf %258, %260 : vector<8x128xf32>
    %264 = arith.addf %263, %262 : vector<8x128xf32>
    %265 = vector.shape_cast %256 : vector<8x128xf32> to vector<8x1x128xf32>
    %266 = vector.broadcast %265 : vector<8x1x128xf32> to vector<8x32x128xf32>
    %267 = arith.mulf %266, %0 : vector<8x32x128xf32>
    %cst_86 = arith.constant dense<0.000000e+00> : vector<32x128xf32>
    %268 = vector.multi_reduction <add>, %267, %cst_86 [0] : vector<8x32x128xf32> to vector<32x128xf32>
    %c0_87 = arith.constant 0 : index
    %c0_88 = arith.constant 0 : index
    %269 = vector.load %arg7[%c0_87, %c0_88] : memref<32x128xf32, #tpu.memory_space<vmem>>, vector<32x128xf32>
    tpu.vector_store %arg7[%c0_87, %c0_88], %268 {strides = array<i32>} : memref<32x128xf32, #tpu.memory_space<vmem>>, vector<32x128xf32>,
    %c0_89 = arith.constant 0 : index
    %c0_90 = arith.constant 0 : index
    %270 = vector.load %arg8[%c0_89, %c0_90] : memref<8x128xf32, #tpu.memory_space<vmem>>, vector<8x128xf32>
    tpu.vector_store %arg8[%c0_89, %c0_90], %264 {strides = array<i32>} : memref<8x128xf32, #tpu.memory_space<vmem>>, vector<8x128xf32>,
    return
  }
  func.func @transform_0(%arg0: i32) -> (i32, i32, i32) {
    %c0_i32 = arith.constant 0 : i32
    %c0_i32_0 = arith.constant 0 : i32
    %c0_i32_1 = arith.constant 0 : i32
    return %c0_i32, %c0_i32_0, %arg0 : i32, i32, i32
  }
  func.func @transform_1(%arg0: i32) -> (i32, i32, i32) {
    %c0_i32 = arith.constant 0 : i32
    %c0_i32_0 = arith.constant 0 : i32
    %c0_i32_1 = arith.constant 0 : i32
    return %c0_i32, %c0_i32_0, %arg0 : i32, i32, i32
  }
  func.func @transform_2(%arg0: i32) -> (i32, i32, i32) {
    %c0_i32 = arith.constant 0 : i32
    %c0_i32_0 = arith.constant 0 : i32
    %c0_i32_1 = arith.constant 0 : i32
    %c0_i32_2 = arith.constant 0 : i32
    return %c0_i32, %c0_i32_0, %c0_i32_1 : i32, i32, i32
  }
  func.func @transform_3(%arg0: i32) -> i32 {
    %c0_i32 = arith.constant 0 : i32
    %c0_i32_0 = arith.constant 0 : i32
    return %c0_i32 : i32
  }
  func.func @transform_4(%arg0: i32) -> i32 {
    %c0_i32 = arith.constant 0 : i32
    %c0_i32_0 = arith.constant 0 : i32
    return %c0_i32 : i32
  }
  func.func @transform_5(%arg0: i32) -> i32 {
    %c0_i32 = arith.constant 0 : i32
    %c0_i32_0 = arith.constant 0 : i32
    return %c0_i32 : i32
  }
  func.func @transform_6(%arg0: i32) -> (i32, i32) {
    %c0_i32 = arith.constant 0 : i32
    %c0_i32_0 = arith.constant 0 : i32
    return %c0_i32, %arg0 : i32, i32
  }
  func.func @transform_7(%arg0: i32) -> (i32, i32) {
    %c0_i32 = arith.constant 0 : i32
    %c0_i32_0 = arith.constant 0 : i32
    return %c0_i32, %arg0 : i32, i32
  }
}

</mosaic_0001>

<llo_original>
// kernel: tpu_custom_call.1
$region0: #{tpu_custom_call.1}
  #allocation0 [shape = 'u32[]', space=smem, size = 0x4, offset = 0x4, fixed_abs, tag = 'smem constant byte address 0x4 - core index']
  #allocation1 [shape = 'u32[72,128]{1,0:T(1,128)}', space=vmem, size = 0x9000, scoped, tag = 'internal scratch']
  #allocation2 [shape = 'f32[1]{0:T(128)S(6)}', space=smem, size = 0x200, scoped, tag = 'scoped memory for tpu_custom_call.1']
  %s0 = inlined_call_operand.hbm [shape: f32[8,32,128], index: 0, kind: input, shape index: {}]
  %s1 = inlined_call_operand.vmem [shape: f32[17,8,128], index: 1, kind: input, shape index: {}]
  %s2 = inlined_call_operand.vmem [shape: f32[7,32,1], index: 2, kind: input, shape index: {}]
  %s3 = inlined_call_operand.vmem [shape: f32[3], index: 3, kind: input, shape index: {}]
  %s4 = inlined_call_operand.vmem [shape: f32[3], index: 4, kind: input, shape index: {}]
  %s5 = inlined_call_operand.<no memory space> [shape: f32[1], index: 5, kind: input, shape index: {}]
  %s6 = inlined_call_operand.hbm [shape: f32[32,128], index: 6, kind: output, shape index: {0}]
  %s7 = inlined_call_operand.hbm [shape: f32[8,128], index: 7, kind: output, shape index: {1}]
  %8 = xla_tuple %s6, %s7
  %s9 = sld [smem:[#allocation0]]
  $region54: #{tpu_custom_call.1} parent=0
    _
  %s11 = ssub.s32 1, %s9
  %s12 = scalar_select 0, %s11, %s9
  %13 = sst [smem:[#allocation2]] %s5
  $region1: #{tpu_custom_call.1} parent=0
    #allocation3 [shape = 'u8[131072]{0}', space=vmem, size = 0x20000, scoped, tag = 'input window, operand 0, single buffered']
    #allocation4 [shape = 's32[1]{0}', space=sflag, size = 0x4, scoped, tag = 'scoped memory for tpu_custom_call.1']
    #allocation5 [shape = 's32[1]{0}', space=sflag, size = 0x4, scoped, tag = 'scoped memory for tpu_custom_call.1']
    #allocation6 [shape = 's32[1]{0}', space=sflag, size = 0x4, scoped, tag = 'scoped memory for tpu_custom_call.1']
    #allocation7 [shape = 'u8[512]{0}', space=smem, size = 0x200, scoped, tag = 'input window, operand 3, single buffered']
    #allocation8 [shape = 'u8[512]{0}', space=smem, size = 0x200, scoped, tag = 'input window, operand 4, single buffered']
    #allocation9 [shape = 's32[1]{0}', space=sflag, size = 0x4, scoped, tag = 'scoped memory for tpu_custom_call.1']
    #allocation10 [shape = 'u8[16384]{0}', space=vmem, size = 0x4000, scoped, tag = 'output window, operand 0, single buffered']
    #allocation11 [shape = 'u8[4096]{0}', space=vmem, size = 0x1000, scoped, tag = 'output window, operand 1, single buffered']
    #allocation12 [shape = 's32[1]{0}', space=sflag, size = 0x4, scoped, tag = 'scoped memory for tpu_custom_call.1']
    %14 = vsyncpa [#allocation4], 0
    %15 = vsyncpa [#allocation6], 0
    %16 = vsyncpa [#allocation9], 0
    %17 = vsyncpa [#allocation5], 0
    %18 = vsyncpa [#allocation12], 0
    // Predicated region
    $region2: #{tpu_custom_call.1} parent=1 // pred_check
      _
    $region3: #{tpu_custom_call.1} parent=1 // pred_check_branch
      %20 = sbr.rel (0) target = $region5
    $region4: #{tpu_custom_call.1} parent=1 // pred_region
      %22 = vsyncadd [#allocation4], 0
      %s23 = sshll.u32 %s0, 4
      %s24 = int_to_ptr.hbm [resolvable:$true] %s23
      %s25 = sshll.u32 [#allocation3], 4
      %s26 = int_to_ptr.vmem [resolvable:$true] %s25
      %31 = dma.hbm_to_vmem [thread:$0]  %s24, 4096, %s26, [#allocation4], 128, 128, 8
    $region5: #{tpu_custom_call.1} parent=1 // pred_fallthru
      _
    // Predicated region
    $region6: #{tpu_custom_call.1} parent=1 // pred_check
      _
    $region7: #{tpu_custom_call.1} parent=1 // pred_check_branch
      %33 = sbr.rel (0) target = $region9
    $region8: #{tpu_custom_call.1} parent=1 // pred_region
      _
    $region9: #{tpu_custom_call.1} parent=1 // pred_fallthru
      _
    // Predicated region
    $region10: #{tpu_custom_call.1} parent=1 // pred_check
      _
    $region11: #{tpu_custom_call.1} parent=1 // pred_check_branch
      %35 = sbr.rel (0) target = $region13
    $region12: #{tpu_custom_call.1} parent=1 // pred_region
      _
    $region13: #{tpu_custom_call.1} parent=1 // pred_fallthru
      _
    // Predicated region
    $region14: #{tpu_custom_call.1} parent=1 // pred_check
      _
    $region15: #{tpu_custom_call.1} parent=1 // pred_check_branch
      %37 = sbr.rel (0) target = $region17
    $region16: #{tpu_custom_call.1} parent=1 // pred_region
      %39 = vsyncadd [#allocation6], 0
      %s41 = sshll.u32 %s3, 4
      %s42 = int_to_ptr.vmem [resolvable:$true] %s41
      %44 = dma.vmem_to_smem %s42, 16, [#allocation7], [#allocation6]
    $region17: #{tpu_custom_call.1} parent=1 // pred_fallthru
      _
    // Predicated region
    $region18: #{tpu_custom_call.1} parent=1 // pred_check
      _
    $region19: #{tpu_custom_call.1} parent=1 // pred_check_branch
      %46 = sbr.rel (0) target = $region21
    $region20: #{tpu_custom_call.1} parent=1 // pred_region
      %48 = vsyncadd [#allocation9], 0
      %s50 = sshll.u32 %s4, 4
      %s51 = int_to_ptr.vmem [resolvable:$true] %s50
      %53 = dma.vmem_to_smem %s51, 16, [#allocation8], [#allocation9]
    $region21: #{tpu_custom_call.1} parent=1 // pred_fallthru
      _
    // Predicated region
    $region22: #{tpu_custom_call.1} parent=1 // pred_check
      _
    $region23: #{tpu_custom_call.1} parent=1 // pred_check_branch
      %55 = sbr.rel (0) target = $region25
    $region24: #{tpu_custom_call.1} parent=1 // pred_region
      _
    $region25: #{tpu_custom_call.1} parent=1 // pred_fallthru
      _
    // Predicated region
    $region26: #{tpu_custom_call.1} parent=1 // pred_check
      _
    $region27: #{tpu_custom_call.1} parent=1 // pred_check_branch
      %57 = sbr.rel (0) target = $region29
    $region28: #{tpu_custom_call.1} parent=1 // pred_region
      %59 = dma.done [#allocation4], 4096
    $region29: #{tpu_custom_call.1} parent=1 // pred_fallthru
      _
    // Predicated region
    $region30: #{tpu_custom_call.1} parent=1 // pred_check
      _
    $region31: #{tpu_custom_call.1} parent=1 // pred_check_branch
      %61 = sbr.rel (0) target = $region33
    $region32: #{tpu_custom_call.1} parent=1 // pred_region
      %63 = dma.done [#allocation6], 16
    $region33: #{tpu_custom_call.1} parent=1 // pred_fallthru
      _
    // Predicated region
    $region34: #{tpu_custom_call.1} parent=1 // pred_check
      _
    $region35: #{tpu_custom_call.1} parent=1 // pred_check_branch
      %65 = sbr.rel (0) target = $region37
    $region36: #{tpu_custom_call.1} parent=1 // pred_region
      %67 = dma.done [#allocation9], 16
    $region37: #{tpu_custom_call.1} parent=1 // pred_fallthru
      _
    %68 = sfence
    %v69 = vld [vmem:[#allocation3] sm:$0xff]
    %v70 = vld [vmem:[#allocation3 + $0x8] sm:$0xff]
    %v71 = vld [vmem:[#allocation3 + $0x10] sm:$0xff]
    %v72 = vld [vmem:[#allocation3 + $0x18] sm:$0xff]
    %v73 = vld [vmem:[#allocation3 + $0x20] sm:$0xff]
    %v74 = vld [vmem:[#allocation3 + $0x28] sm:$0xff]
    %v75 = vld [vmem:[#allocation3 + $0x30] sm:$0xff]
    %v76 = vld [vmem:[#allocation3 + $0x38] sm:$0xff]
    %v77 = vld [vmem:[#allocation3 + $0x40] sm:$0xff]
    %v78 = vld [vmem:[#allocation3 + $0x48] sm:$0xff]
    %v79 = vld [vmem:[#allocation3 + $0x50] sm:$0xff]
    %v80 = vld [vmem:[#allocation3 + $0x58] sm:$0xff]
    %v81 = vld [vmem:[#allocation3 + $0x60] sm:$0xff]
    %v82 = vld [vmem:[#allocation3 + $0x68] sm:$0xff]
    %v83 = vld [vmem:[#allocation3 + $0x70] sm:$0xff]
    %v84 = vld [vmem:[#allocation3 + $0x78] sm:$0xff]
    %v85 = vld [vmem:[#allocation3 + $0x80] sm:$0xff]
    %v86 = vld [vmem:[#allocation3 + $0x88] sm:$0xff]
    %v87 = vld [vmem:[#allocation3 + $0x90] sm:$0xff]
    %v88 = vld [vmem:[#allocation3 + $0x98] sm:$0xff]
    %v89 = vld [vmem:[#allocation3 + $0xa0] sm:$0xff]
    %v90 = vld [vmem:[#allocation3 + $0xa8] sm:$0xff]
    %v91 = vld [vmem:[#allocation3 + $0xb0] sm:$0xff]
    %v92 = vld [vmem:[#allocation3 + $0xb8] sm:$0xff]
    %v93 = vld [vmem:[#allocation3 + $0xc0] sm:$0xff]
    %v94 = vld [vmem:[#allocation3 + $0xc8] sm:$0xff]
    %v95 = vld [vmem:[#allocation3 + $0xd0] sm:$0xff]
    %v96 = vld [vmem:[#allocation3 + $0xd8] sm:$0xff]
    %v97 = vld [vmem:[#allocation3 + $0xe0] sm:$0xff]
    %v98 = vld [vmem:[#allocation3 + $0xe8] sm:$0xff]
    %v99 = vld [vmem:[#allocation3 + $0xf0] sm:$0xff]
    %v100 = vld [vmem:[#allocation3 + $0xf8] sm:$0xff]
    %v101 = vld [vmem:[%s2] sm:$0xff]
    %v102 = vld [vmem:[%s2 + $0x8] sm:$0xff]
    %v103 = vld [vmem:[%s2 + $0x10] sm:$0xff]
    %v104 = vld [vmem:[%s2 + $0x18] sm:$0xff]
    %106 = vset.pattern.permute.xlu0 0
    %107 = vperm.xlu0 %106, %v101
    %v108 = vpop.permute.xlu0 %107
    %111 = vset.pattern.permute.xlu0 0
    %112 = vperm.xlu0 %111, %v102
    %v113 = vpop.permute.xlu0 %112
    %116 = vset.pattern.permute.xlu0 0
    %117 = vperm.xlu0 %116, %v103
    %v118 = vpop.permute.xlu0 %117
    %121 = vset.pattern.permute.xlu0 0
    %122 = vperm.xlu0 %121, %v104
    %v123 = vpop.permute.xlu0 %122
    %v125 = vmul.f32 %v69, %v108
    %v126 = vmul.f32 %v70, %v113
    %v127 = vmul.f32 %v71, %v118
    %v128 = vmul.f32 %v72, %v123
    %v129 = vmul.f32 %v73, %v108
    %v130 = vmul.f32 %v74, %v113
    %v131 = vmul.f32 %v75, %v118
    %v132 = vmul.f32 %v76, %v123
    %v133 = vmul.f32 %v77, %v108
    %v134 = vmul.f32 %v78, %v113
    %v135 = vmul.f32 %v79, %v118
    %v136 = vmul.f32 %v80, %v123
    %v137 = vmul.f32 %v81, %v108
    %v138 = vmul.f32 %v82, %v113
    %v139 = vmul.f32 %v83, %v118
    %v140 = vmul.f32 %v84, %v123
    %v141 = vmul.f32 %v85, %v108
    %v142 = vmul.f32 %v86, %v113
    %v143 = vmul.f32 %v87, %v118
    %v144 = vmul.f32 %v88, %v123
    %v145 = vmul.f32 %v89, %v108
    %v146 = vmul.f32 %v90, %v113
    %v147 = vmul.f32 %v91, %v118
    %v148 = vmul.f32 %v92, %v123
    %v149 = vmul.f32 %v93, %v108
    %v150 = vmul.f32 %v94, %v113
    %v151 = vmul.f32 %v95, %v118
    %v152 = vmul.f32 %v96, %v123
    %v153 = vmul.f32 %v97, %v108
    %v154 = vmul.f32 %v98, %v113
    %v155 = vmul.f32 %v99, %v118
    %v156 = vmul.f32 %v100, %v123
    %v157 = vadd.f32 %v125, %v126
    %v158 = vadd.f32 %v157, %v127
    %v159 = vadd.f32 %v158, %v128
    %v160 = vrot.slane %v159, 4
    %v161 = vadd.f32 %v159, %v160
    %v162 = vrot.slane %v161, 2
    %v163 = vadd.f32 %v161, %v162
    %v164 = vrot.slane %v163, 1
    %v165 = vadd.f32 %v163, %v164
    %v166 = vadd.f32 %v129, %v130
    %v167 = vadd.f32 %v166, %v131
    %v168 = vadd.f32 %v167, %v132
    %v169 = vrot.slane %v168, 4
    %v170 = vadd.f32 %v168, %v169
    %v171 = vrot.slane %v170, 2
    %v172 = vadd.f32 %v170, %v171
    %v173 = vrot.slane %v172, 1
    %v174 = vadd.f32 %v172, %v173
    %v175 = vadd.f32 %v133, %v134
    %v176 = vadd.f32 %v175, %v135
    %v177 = vadd.f32 %v176, %v136
    %v178 = vrot.slane %v177, 4
    %v179 = vadd.f32 %v177, %v178
    %v180 = vrot.slane %v179, 2
    %v181 = vadd.f32 %v179, %v180
    %v182 = vrot.slane %v181, 1
    %v183 = vadd.f32 %v181, %v182
    %v184 = vadd.f32 %v137, %v138
    %v185 = vadd.f32 %v184, %v139
    %v186 = vadd.f32 %v185, %v140
    %v187 = vrot.slane %v186, 4
    %v188 = vadd.f32 %v186, %v187
    %v189 = vrot.slane %v188, 2
    %v190 = vadd.f32 %v188, %v189
    %v191 = vrot.slane %v190, 1
    %v192 = vadd.f32 %v190, %v191
    %v193 = vadd.f32 %v141, %v142
    %v194 = vadd.f32 %v193, %v143
    %v195 = vadd.f32 %v194, %v144
    %v196 = vrot.slane %v195, 4
    %v197 = vadd.f32 %v195, %v196
    %v198 = vrot.slane %v197, 2
    %v199 = vadd.f32 %v197, %v198
    %v200 = vrot.slane %v199, 1
    %v201 = vadd.f32 %v199, %v200
    %v202 = vadd.f32 %v145, %v146
    %v203 = vadd.f32 %v202, %v147
    %v204 = vadd.f32 %v203, %v148
    %v205 = vrot.slane %v204, 4
    %v206 = vadd.f32 %v204, %v205
    %v207 = vrot.slane %v206, 2
    %v208 = vadd.f32 %v206, %v207
    %v209 = vrot.slane %v208, 1
    %v210 = vadd.f32 %v208, %v209
    %v211 = vadd.f32 %v149, %v150
    %v212 = vadd.f32 %v211, %v151
    %v213 = vadd.f32 %v212, %v152
    %v214 = vrot.slane %v213, 4
    %v215 = vadd.f32 %v213, %v214
    %v216 = vrot.slane %v215, 2
    %v217 = vadd.f32 %v215, %v216
    %v218 = vrot.slane %v217, 1
    %v219 = vadd.f32 %v217, %v218
    %v220 = vadd.f32 %v153, %v154
    %v221 = vadd.f32 %v220, %v155
    %v222 = vadd.f32 %v221, %v156
    %v223 = vrot.slane %v222, 4
    %v224 = vadd.f32 %v222, %v223
    %v225 = vrot.slane %v224, 2
    %v226 = vadd.f32 %v224, %v225
    %v227 = vrot.slane %v226, 1
    %v228 = vadd.f32 %v226, %v227
    %s229 = scalar_lea.vmem %s2, 32
    %v230 = vld [vmem:[%s229] sm:$0xff]
    %v231 = vld [vmem:[%s229 + $0x8] sm:$0xff]
    %v232 = vld [vmem:[%s229 + $0x10] sm:$0xff]
    %v233 = vld [vmem:[%s229 + $0x18] sm:$0xff]
    %235 = vset.pattern.permute.xlu0 0
    %236 = vperm.xlu0 %235, %v230
    %v237 = vpop.permute.xlu0 %236
    %240 = vset.pattern.permute.xlu0 0
    %241 = vperm.xlu0 %240, %v231
    %v242 = vpop.permute.xlu0 %241
    %245 = vset.pattern.permute.xlu0 0
    %246 = vperm.xlu0 %245, %v232
    %v247 = vpop.permute.xlu0 %246
    %250 = vset.pattern.permute.xlu0 0
    %251 = vperm.xlu0 %250, %v233
    %v252 = vpop.permute.xlu0 %251
    %v254 = vmul.f32 %v69, %v237
    %v255 = vmul.f32 %v70, %v242
    %v256 = vmul.f32 %v71, %v247
    %v257 = vmul.f32 %v72, %v252
    %v258 = vmul.f32 %v73, %v237
    %v259 = vmul.f32 %v74, %v242
    %v260 = vmul.f32 %v75, %v247
    %v261 = vmul.f32 %v76, %v252
    %v262 = vmul.f32 %v77, %v237
    %v263 = vmul.f32 %v78, %v242
    %v264 = vmul.f32 %v79, %v247
    %v265 = vmul.f32 %v80, %v252
    %v266 = vmul.f32 %v81, %v237
    %v267 = vmul.f32 %v82, %v242
    %v268 = vmul.f32 %v83, %v247
    %v269 = vmul.f32 %v84, %v252
    %v270 = vmul.f32 %v85, %v237
    %v271 = vmul.f32 %v86, %v242
    %v272 = vmul.f32 %v87, %v247
    %v273 = vmul.f32 %v88, %v252
    %v274 = vmul.f32 %v89, %v237
    %v275 = vmul.f32 %v90, %v242
    %v276 = vmul.f32 %v91, %v247
    %v277 = vmul.f32 %v92, %v252
    %v278 = vmul.f32 %v93, %v237
    %v279 = vmul.f32 %v94, %v242
    %v280 = vmul.f32 %v95, %v247
    %v281 = vmul.f32 %v96, %v252
    %v282 = vmul.f32 %v97, %v237
    %v283 = vmul.f32 %v98, %v242
    %v284 = vmul.f32 %v99, %v247
    %v285 = vmul.f32 %v100, %v252
    %v286 = vadd.f32 %v254, %v255
    %v287 = vadd.f32 %v286, %v256
    %v288 = vadd.f32 %v287, %v257
    %v289 = vrot.slane %v288, 4
    %v290 = vadd.f32 %v288, %v289
    %v291 = vrot.slane %v290, 2
    %v292 = vadd.f32 %v290, %v291
    %v293 = vrot.slane %v292, 1
    %v294 = vadd.f32 %v292, %v293
    %v295 = vadd.f32 %v258, %v259
    %v296 = vadd.f32 %v295, %v260
    %v297 = vadd.f32 %v296, %v261
    %v298 = vrot.slane %v297, 4
    %v299 = vadd.f32 %v297, %v298
    %v300 = vrot.slane %v299, 2
    %v301 = vadd.f32 %v299, %v300
    %v302 = vrot.slane %v301, 1
    %v303 = vadd.f32 %v301, %v302
    %v304 = vadd.f32 %v262, %v263
    %v305 = vadd.f32 %v304, %v264
    %v306 = vadd.f32 %v305, %v265
    %v307 = vrot.slane %v306, 4
    %v308 = vadd.f32 %v306, %v307
    %v309 = vrot.slane %v308, 2
    %v310 = vadd.f32 %v308, %v309
    %v311 = vrot.slane %v310, 1
    %v312 = vadd.f32 %v310, %v311
    %v313 = vadd.f32 %v266, %v267
    %v314 = vadd.f32 %v313, %v268
    %v315 = vadd.f32 %v314, %v269
    %v316 = vrot.slane %v315, 4
    %v317 = vadd.f32 %v315, %v316
    %v318 = vrot.slane %v317, 2
    %v319 = vadd.f32 %v317, %v318
    %v320 = vrot.slane %v319, 1
    %v321 = vadd.f32 %v319, %v320
    %v322 = vadd.f32 %v270, %v271
    %v323 = vadd.f32 %v322, %v272
    %v324 = vadd.f32 %v323, %v273
    %v325 = vrot.slane %v324, 4
    %v326 = vadd.f32 %v324, %v325
    %v327 = vrot.slane %v326, 2
    %v328 = vadd.f32 %v326, %v327
    %v329 = vrot.slane %v328, 1
    %v330 = vadd.f32 %v328, %v329
    %v331 = vadd.f32 %v274, %v275
    %v332 = vadd.f32 %v331, %v276
    %v333 = vadd.f32 %v332, %v277
    %v334 = vrot.slane %v333, 4
    %v335 = vadd.f32 %v333, %v334
    %v336 = vrot.slane %v335, 2
    %v337 = vadd.f32 %v335, %v336
    %v338 = vrot.slane %v337, 1
    %v339 = vadd.f32 %v337, %v338
    %v340 = vadd.f32 %v278, %v279
    %v341 = vadd.f32 %v340, %v280
    %v342 = vadd.f32 %v341, %v281
    %v343 = vrot.slane %v342, 4
    %v344 = vadd.f32 %v342, %v343
    %v345 = vrot.slane %v344, 2
    %v346 = vadd.f32 %v344, %v345
    %v347 = vrot.slane %v346, 1
    %v348 = vadd.f32 %v346, %v347
    %v349 = vadd.f32 %v282, %v283
    %v350 = vadd.f32 %v349, %v284
    %v351 = vadd.f32 %v350, %v285
    %v352 = vrot.slane %v351, 4
    %v353 = vadd.f32 %v351, %v352
    %v354 = vrot.slane %v353, 2
    %v355 = vadd.f32 %v353, %v354
    %v356 = vrot.slane %v355, 1
    %v357 = vadd.f32 %v355, %v356
    %s358 = scalar_lea.vmem %s2, 64
    %v359 = vld [vmem:[%s358] sm:$0xff]
    %v360 = vld [vmem:[%s358 + $0x8] sm:$0xff]
    %v361 = vld [vmem:[%s358 + $0x10] sm:$0xff]
    %v362 = vld [vmem:[%s358 + $0x18] sm:$0xff]
    %364 = vset.pattern.permute.xlu0 0
    %365 = vperm.xlu0 %364, %v359
    %v366 = vpop.permute.xlu0 %365
    %369 = vset.pattern.permute.xlu0 0
    %370 = vperm.xlu0 %369, %v360
    %v371 = vpop.permute.xlu0 %370
    %374 = vset.pattern.permute.xlu0 0
    %375 = vperm.xlu0 %374, %v361
    %v376 = vpop.permute.xlu0 %375
    %379 = vset.pattern.permute.xlu0 0
    %380 = vperm.xlu0 %379, %v362
    %v381 = vpop.permute.xlu0 %380
    %v383 = vmul.f32 %v69, %v366
    %v384 = vmul.f32 %v70, %v371
    %v385 = vmul.f32 %v71, %v376
    %v386 = vmul.f32 %v72, %v381
    %v387 = vmul.f32 %v73, %v366
    %v388 = vmul.f32 %v74, %v371
    %v389 = vmul.f32 %v75, %v376
    %v390 = vmul.f32 %v76, %v381
    %v391 = vmul.f32 %v77, %v366
    %v392 = vmul.f32 %v78, %v371
    %v393 = vmul.f32 %v79, %v376
    %v394 = vmul.f32 %v80, %v381
    %v395 = vmul.f32 %v81, %v366
    %v396 = vmul.f32 %v82, %v371
    %v397 = vmul.f32 %v83, %v376
    %v398 = vmul.f32 %v84, %v381
    %v399 = vmul.f32 %v85, %v366
    %v400 = vmul.f32 %v86, %v371
    %v401 = vmul.f32 %v87, %v376
    %v402 = vmul.f32 %v88, %v381
    %v403 = vmul.f32 %v89, %v366
    %v404 = vmul.f32 %v90, %v371
    %v405 = vmul.f32 %v91, %v376
    %v406 = vmul.f32 %v92, %v381
    %v407 = vmul.f32 %v93, %v366
    %v408 = vmul.f32 %v94, %v371
    %v409 = vmul.f32 %v95, %v376
    %v410 = vmul.f32 %v96, %v381
    %v411 = vmul.f32 %v97, %v366
    %v412 = vmul.f32 %v98, %v371
    %v413 = vmul.f32 %v99, %v376
    %v414 = vmul.f32 %v100, %v381
    %v415 = vadd.f32 %v383, %v384
    %v416 = vadd.f32 %v415, %v385
    %v417 = vadd.f32 %v416, %v386
    %v418 = vrot.slane %v417, 4
    %v419 = vadd.f32 %v417, %v418
    %v420 = vrot.slane %v419, 2
    %v421 = vadd.f32 %v419, %v420
    %v422 = vrot.slane %v421, 1
    %v423 = vadd.f32 %v421, %v422
    %v424 = vadd.f32 %v387, %v388
    %v425 = vadd.f32 %v424, %v389
    %v426 = vadd.f32 %v425, %v390
    %v427 = vrot.slane %v426, 4
    %v428 = vadd.f32 %v426, %v427
    %v429 = vrot.slane %v428, 2
    %v430 = vadd.f32 %v428, %v429
    %v431 = vrot.slane %v430, 1
    %v432 = vadd.f32 %v430, %v431
    %v433 = vadd.f32 %v391, %v392
    %v434 = vadd.f32 %v433, %v393
    %v435 = vadd.f32 %v434, %v394
    %v436 = vrot.slane %v435, 4
    %v437 = vadd.f32 %v435, %v436
    %v438 = vrot.slane %v437, 2
    %v439 = vadd.f32 %v437, %v438
    %v440 = vrot.slane %v439, 1
    %v441 = vadd.f32 %v439, %v440
    %v442 = vadd.f32 %v395, %v396
    %v443 = vadd.f32 %v442, %v397
    %v444 = vadd.f32 %v443, %v398
    %v445 = vrot.slane %v444, 4
    %v446 = vadd.f32 %v444, %v445
    %v447 = vrot.slane %v446, 2
    %v448 = vadd.f32 %v446, %v447
    %v449 = vrot.slane %v448, 1
    %v450 = vadd.f32 %v448, %v449
    %v451 = vadd.f32 %v399, %v400
    %v452 = vadd.f32 %v451, %v401
    %v453 = vadd.f32 %v452, %v402
    %v454 = vrot.slane %v453, 4
    %v455 = vadd.f32 %v453, %v454
    %v456 = vrot.slane %v455, 2
    %v457 = vadd.f32 %v455, %v456
    %v458 = vrot.slane %v457, 1
    %v459 = vadd.f32 %v457, %v458
    %v460 = vadd.f32 %v403, %v404
    %v461 = vadd.f32 %v460, %v405
    %v462 = vadd.f32 %v461, %v406
    %v463 = vrot.slane %v462, 4
    %v464 = vadd.f32 %v462, %v463
    %v465 = vrot.slane %v464, 2
    %v466 = vadd.f32 %v464, %v465
    %v467 = vrot.slane %v466, 1
    %v468 = vadd.f32 %v466, %v467
    %v469 = vadd.f32 %v407, %v408
    %v470 = vadd.f32 %v469, %v409
    %v471 = vadd.f32 %v470, %v410
    %v472 = vrot.slane %v471, 4
    %v473 = vadd.f32 %v471, %v472
    %v474 = vrot.slane %v473, 2
    %v475 = vadd.f32 %v473, %v474
    %v476 = vrot.slane %v475, 1
    %v477 = vadd.f32 %v475, %v476
    %v478 = vadd.f32 %v411, %v412
    %v479 = vadd.f32 %v478, %v413
    %v480 = vadd.f32 %v479, %v414
    %v481 = vrot.slane %v480, 4
    %v482 = vadd.f32 %v480, %v481
    %v483 = vrot.slane %v482, 2
    %v484 = vadd.f32 %v482, %v483
    %v485 = vrot.slane %v484, 1
    %v486 = vadd.f32 %v484, %v485
    %s487 = scalar_lea.vmem %s2, 96
    %v488 = vld [vmem:[%s487] sm:$0xff]
    %v489 = vld [vmem:[%s487 + $0x8] sm:$0xff]
    %v490 = vld [vmem:[%s487 + $0x10] sm:$0xff]
    %v491 = vld [vmem:[%s487 + $0x18] sm:$0xff]
    %493 = vset.pattern.permute.xlu0 0
    %494 = vperm.xlu0 %493, %v488
    %v495 = vpop.permute.xlu0 %494
    %498 = vset.pattern.permute.xlu0 0
    %499 = vperm.xlu0 %498, %v489
    %v500 = vpop.permute.xlu0 %499
    %503 = vset.pattern.permute.xlu0 0
    %504 = vperm.xlu0 %503, %v490
    %v505 = vpop.permute.xlu0 %504
    %508 = vset.pattern.permute.xlu0 0
    %509 = vperm.xlu0 %508, %v491
    %v510 = vpop.permute.xlu0 %509
    %v512 = vmul.f32 %v69, %v495
    %v513 = vmul.f32 %v70, %v500
    %v514 = vmul.f32 %v71, %v505
    %v515 = vmul.f32 %v72, %v510
    %v516 = vmul.f32 %v73, %v495
    %v517 = vmul.f32 %v74, %v500
    %v518 = vmul.f32 %v75, %v505
    %v519 = vmul.f32 %v76, %v510
    %v520 = vmul.f32 %v77, %v495
    %v521 = vmul.f32 %v78, %v500
    %v522 = vmul.f32 %v79, %v505
    %v523 = vmul.f32 %v80, %v510
    %v524 = vmul.f32 %v81, %v495
    %v525 = vmul.f32 %v82, %v500
    %v526 = vmul.f32 %v83, %v505
    %v527 = vmul.f32 %v84, %v510
    %v528 = vmul.f32 %v85, %v495
    %v529 = vmul.f32 %v86, %v500
    %v530 = vmul.f32 %v87, %v505
    %v531 = vmul.f32 %v88, %v510
    %v532 = vmul.f32 %v89, %v495
    %v533 = vmul.f32 %v90, %v500
    %v534 = vmul.f32 %v91, %v505
    %v535 = vmul.f32 %v92, %v510
    %v536 = vmul.f32 %v93, %v495
    %v537 = vmul.f32 %v94, %v500
    %v538 = vmul.f32 %v95, %v505
    %v539 = vmul.f32 %v96, %v510
    %v540 = vmul.f32 %v97, %v495
    %v541 = vmul.f32 %v98, %v500
    %v542 = vmul.f32 %v99, %v505
    %v543 = vmul.f32 %v100, %v510
    %v544 = vadd.f32 %v512, %v513
    %v545 = vadd.f32 %v544, %v514
    %v546 = vadd.f32 %v545, %v515
    %v547 = vrot.slane %v546, 4
    %v548 = vadd.f32 %v546, %v547
    %v549 = vrot.slane %v548, 2
    %v550 = vadd.f32 %v548, %v549
    %v551 = vrot.slane %v550, 1
    %v552 = vadd.f32 %v550, %v551
    %v553 = vadd.f32 %v516, %v517
    %v554 = vadd.f32 %v553, %v518
    %v555 = vadd.f32 %v554, %v519
    %v556 = vrot.slane %v555, 4
    %v557 = vadd.f32 %v555, %v556
    %v558 = vrot.slane %v557, 2
    %v559 = vadd.f32 %v557, %v558
    %v560 = vrot.slane %v559, 1
    %v561 = vadd.f32 %v559, %v560
    %v562 = vadd.f32 %v520, %v521
    %v563 = vadd.f32 %v562, %v522
    %v564 = vadd.f32 %v563, %v523
    %v565 = vrot.slane %v564, 4
    %v566 = vadd.f32 %v564, %v565
    %v567 = vrot.slane %v566, 2
    %v568 = vadd.f32 %v566, %v567
    %v569 = vrot.slane %v568, 1
    %v570 = vadd.f32 %v568, %v569
    %v571 = vadd.f32 %v524, %v525
    %v572 = vadd.f32 %v571, %v526
    %v573 = vadd.f32 %v572, %v527
    %v574 = vrot.slane %v573, 4
    %v575 = vadd.f32 %v573, %v574
    %v576 = vrot.slane %v575, 2
    %v577 = vadd.f32 %v575, %v576
    %v578 = vrot.slane %v577, 1
    %v579 = vadd.f32 %v577, %v578
    %v580 = vadd.f32 %v528, %v529
    %v581 = vadd.f32 %v580, %v530
    %v582 = vadd.f32 %v581, %v531
    %v583 = vrot.slane %v582, 4
    %v584 = vadd.f32 %v582, %v583
    %v585 = vrot.slane %v584, 2
    %v586 = vadd.f32 %v584, %v585
    %v587 = vrot.slane %v586, 1
    %v588 = vadd.f32 %v586, %v587
    %v589 = vadd.f32 %v532, %v533
    %v590 = vadd.f32 %v589, %v534
    %v591 = vadd.f32 %v590, %v535
    %v592 = vrot.slane %v591, 4
    %v593 = vadd.f32 %v591, %v592
    %v594 = vrot.slane %v593, 2
    %v595 = vadd.f32 %v593, %v594
    %v596 = vrot.slane %v595, 1
    %v597 = vadd.f32 %v595, %v596
    %v598 = vadd.f32 %v536, %v537
    %v599 = vadd.f32 %v598, %v538
    %v600 = vadd.f32 %v599, %v539
    %v601 = vrot.slane %v600, 4
    %v602 = vadd.f32 %v600, %v601
    %v603 = vrot.slane %v602, 2
    %v604 = vadd.f32 %v602, %v603
    %v605 = vrot.slane %v604, 1
    %v606 = vadd.f32 %v604, %v605
    %v607 = vadd.f32 %v540, %v541
    %v608 = vadd.f32 %v607, %v542
    %v609 = vadd.f32 %v608, %v543
    %v610 = vrot.slane %v609, 4
    %v611 = vadd.f32 %v609, %v610
    %v612 = vrot.slane %v611, 2
    %v613 = vadd.f32 %v611, %v612
    %v614 = vrot.slane %v613, 1
    %v615 = vadd.f32 %v613, %v614
    %s616 = scalar_lea.vmem %s2, 128
    %v617 = vld [vmem:[%s616] sm:$0xff]
    %v618 = vld [vmem:[%s616 + $0x8] sm:$0xff]
    %v619 = vld [vmem:[%s616 + $0x10] sm:$0xff]
    %v620 = vld [vmem:[%s616 + $0x18] sm:$0xff]
    %622 = vset.pattern.permute.xlu0 0
    %623 = vperm.xlu0 %622, %v617
    %v624 = vpop.permute.xlu0 %623
    %627 = vset.pattern.permute.xlu0 0
    %628 = vperm.xlu0 %627, %v618
    %v629 = vpop.permute.xlu0 %628
    %632 = vset.pattern.permute.xlu0 0
    %633 = vperm.xlu0 %632, %v619
    %v634 = vpop.permute.xlu0 %633
    %637 = vset.pattern.permute.xlu0 0
    %638 = vperm.xlu0 %637, %v620
    %v639 = vpop.permute.xlu0 %638
    %v641 = vmul.f32 %v69, %v624
    %v642 = vmul.f32 %v70, %v629
    %v643 = vmul.f32 %v71, %v634
    %v644 = vmul.f32 %v72, %v639
    %v645 = vmul.f32 %v73, %v624
    %v646 = vmul.f32 %v74, %v629
    %v647 = vmul.f32 %v75, %v634
    %v648 = vmul.f32 %v76, %v639
    %v649 = vmul.f32 %v77, %v624
    %v650 = vmul.f32 %v78, %v629
    %v651 = vmul.f32 %v79, %v634
    %v652 = vmul.f32 %v80, %v639
    %v653 = vmul.f32 %v81, %v624
    %v654 = vmul.f32 %v82, %v629
    %v655 = vmul.f32 %v83, %v634
    %v656 = vmul.f32 %v84, %v639
    %v657 = vmul.f32 %v85, %v624
    %v658 = vmul.f32 %v86, %v629
    %v659 = vmul.f32 %v87, %v634
    %v660 = vmul.f32 %v88, %v639
    %v661 = vmul.f32 %v89, %v624
    %v662 = vmul.f32 %v90, %v629
    %v663 = vmul.f32 %v91, %v634
    %v664 = vmul.f32 %v92, %v639
    %v665 = vmul.f32 %v93, %v624
    %v666 = vmul.f32 %v94, %v629
    %v667 = vmul.f32 %v95, %v634
    %v668 = vmul.f32 %v96, %v639
    %v669 = vmul.f32 %v97, %v624
    %v670 = vmul.f32 %v98, %v629
    %v671 = vmul.f32 %v99, %v634
    %v672 = vmul.f32 %v100, %v639
    %v673 = vadd.f32 %v641, %v642
    %v674 = vadd.f32 %v673, %v643
    %v675 = vadd.f32 %v674, %v644
    %v676 = vrot.slane %v675, 4
    %v677 = vadd.f32 %v675, %v676
    %v678 = vrot.slane %v677, 2
    %v679 = vadd.f32 %v677, %v678
    %v680 = vrot.slane %v679, 1
    %v681 = vadd.f32 %v679, %v680
    %v682 = vadd.f32 %v645, %v646
    %v683 = vadd.f32 %v682, %v647
    %v684 = vadd.f32 %v683, %v648
    %v685 = vrot.slane %v684, 4
    %v686 = vadd.f32 %v684, %v685
    %v687 = vrot.slane %v686, 2
    %v688 = vadd.f32 %v686, %v687
    %v689 = vrot.slane %v688, 1
    %v690 = vadd.f32 %v688, %v689
    %v691 = vadd.f32 %v649, %v650
    %v692 = vadd.f32 %v691, %v651
    %v693 = vadd.f32 %v692, %v652
    %v694 = vrot.slane %v693, 4
    %v695 = vadd.f32 %v693, %v694
    %v696 = vrot.slane %v695, 2
    %v697 = vadd.f32 %v695, %v696
    %v698 = vrot.slane %v697, 1
    %v699 = vadd.f32 %v697, %v698
    %v700 = vadd.f32 %v653, %v654
    %v701 = vadd.f32 %v700, %v655
    %v702 = vadd.f32 %v701, %v656
    %v703 = vrot.slane %v702, 4
    %v704 = vadd.f32 %v702, %v703
    %v705 = vrot.slane %v704, 2
    %v706 = vadd.f32 %v704, %v705
    %v707 = vrot.slane %v706, 1
    %v708 = vadd.f32 %v706, %v707
    %v709 = vadd.f32 %v657, %v658
    %v710 = vadd.f32 %v709, %v659
    %v711 = vadd.f32 %v710, %v660
    %v712 = vrot.slane %v711, 4
    %v713 = vadd.f32 %v711, %v712
    %v714 = vrot.slane %v713, 2
    %v715 = vadd.f32 %v713, %v714
    %v716 = vrot.slane %v715, 1
    %v717 = vadd.f32 %v715, %v716
    %v718 = vadd.f32 %v661, %v662
    %v719 = vadd.f32 %v718, %v663
    %v720 = vadd.f32 %v719, %v664
    %v721 = vrot.slane %v720, 4
    %v722 = vadd.f32 %v720, %v721
    %v723 = vrot.slane %v722, 2
    %v724 = vadd.f32 %v722, %v723
    %v725 = vrot.slane %v724, 1
    %v726 = vadd.f32 %v724, %v725
    %v727 = vadd.f32 %v665, %v666
    %v728 = vadd.f32 %v727, %v667
    %v729 = vadd.f32 %v728, %v668
    %v730 = vrot.slane %v729, 4
    %v731 = vadd.f32 %v729, %v730
    %v732 = vrot.slane %v731, 2
    %v733 = vadd.f32 %v731, %v732
    %v734 = vrot.slane %v733, 1
    %v735 = vadd.f32 %v733, %v734
    %v736 = vadd.f32 %v669, %v670
    %v737 = vadd.f32 %v736, %v671
    %v738 = vadd.f32 %v737, %v672
    %v739 = vrot.slane %v738, 4
    %v740 = vadd.f32 %v738, %v739
    %v741 = vrot.slane %v740, 2
    %v742 = vadd.f32 %v740, %v741
    %v743 = vrot.slane %v742, 1
    %v744 = vadd.f32 %v742, %v743
    %s745 = scalar_lea.vmem %s2, 160
    %v746 = vld [vmem:[%s745] sm:$0xff]
    %v747 = vld [vmem:[%s745 + $0x8] sm:$0xff]
    %v748 = vld [vmem:[%s745 + $0x10] sm:$0xff]
    %v749 = vld [vmem:[%s745 + $0x18] sm:$0xff]
    %751 = vset.pattern.permute.xlu0 0
    %752 = vperm.xlu0 %751, %v746
    %v753 = vpop.permute.xlu0 %752
    %756 = vset.pattern.permute.xlu0 0
    %757 = vperm.xlu0 %756, %v747
    %v758 = vpop.permute.xlu0 %757
    %761 = vset.pattern.permute.xlu0 0
    %762 = vperm.xlu0 %761, %v748
    %v763 = vpop.permute.xlu0 %762
    %766 = vset.pattern.permute.xlu0 0
    %767 = vperm.xlu0 %766, %v749
    %v768 = vpop.permute.xlu0 %767
    %v770 = vmul.f32 %v69, %v753
    %v771 = vmul.f32 %v70, %v758
    %v772 = vmul.f32 %v71, %v763
    %v773 = vmul.f32 %v72, %v768
    %v774 = vmul.f32 %v73, %v753
    %v775 = vmul.f32 %v74, %v758
    %v776 = vmul.f32 %v75, %v763
    %v777 = vmul.f32 %v76, %v768
    %v778 = vmul.f32 %v77, %v753
    %v779 = vmul.f32 %v78, %v758
    %v780 = vmul.f32 %v79, %v763
    %v781 = vmul.f32 %v80, %v768
    %v782 = vmul.f32 %v81, %v753
    %v783 = vmul.f32 %v82, %v758
    %v784 = vmul.f32 %v83, %v763
    %v785 = vmul.f32 %v84, %v768
    %v786 = vmul.f32 %v85, %v753
    %v787 = vmul.f32 %v86, %v758
    %v788 = vmul.f32 %v87, %v763
    %v789 = vmul.f32 %v88, %v768
    %v790 = vmul.f32 %v89, %v753
    %v791 = vmul.f32 %v90, %v758
    %v792 = vmul.f32 %v91, %v763
    %v793 = vmul.f32 %v92, %v768
    %v794 = vmul.f32 %v93, %v753
    %v795 = vmul.f32 %v94, %v758
    %v796 = vmul.f32 %v95, %v763
    %v797 = vmul.f32 %v96, %v768
    %v798 = vmul.f32 %v97, %v753
    %v799 = vmul.f32 %v98, %v758
    %v800 = vmul.f32 %v99, %v763
    %v801 = vmul.f32 %v100, %v768
    %v802 = vadd.f32 %v770, %v771
    %v803 = vadd.f32 %v802, %v772
    %v804 = vadd.f32 %v803, %v773
    %v805 = vrot.slane %v804, 4
    %v806 = vadd.f32 %v804, %v805
    %v807 = vrot.slane %v806, 2
    %v808 = vadd.f32 %v806, %v807
    %v809 = vrot.slane %v808, 1
    %v810 = vadd.f32 %v808, %v809
    %v811 = vadd.f32 %v774, %v775
    %v812 = vadd.f32 %v811, %v776
    %v813 = vadd.f32 %v812, %v777
    %v814 = vrot.slane %v813, 4
    %v815 = vadd.f32 %v813, %v814
    %v816 = vrot.slane %v815, 2
    %v817 = vadd.f32 %v815, %v816
    %v818 = vrot.slane %v817, 1
    %v819 = vadd.f32 %v817, %v818
    %v820 = vadd.f32 %v778, %v779
    %v821 = vadd.f32 %v820, %v780
    %v822 = vadd.f32 %v821, %v781
    %v823 = vrot.slane %v822, 4
    %v824 = vadd.f32 %v822, %v823
    %v825 = vrot.slane %v824, 2
    %v826 = vadd.f32 %v824, %v825
    %v827 = vrot.slane %v826, 1
    %v828 = vadd.f32 %v826, %v827
    %v829 = vadd.f32 %v782, %v783
    %v830 = vadd.f32 %v829, %v784
    %v831 = vadd.f32 %v830, %v785
    %v832 = vrot.slane %v831, 4
    %v833 = vadd.f32 %v831, %v832
    %v834 = vrot.slane %v833, 2
    %v835 = vadd.f32 %v833, %v834
    %v836 = vrot.slane %v835, 1
    %v837 = vadd.f32 %v835, %v836
    %v838 = vadd.f32 %v786, %v787
    %v839 = vadd.f32 %v838, %v788
    %v840 = vadd.f32 %v839, %v789
    %v841 = vrot.slane %v840, 4
    %v842 = vadd.f32 %v840, %v841
    %v843 = vrot.slane %v842, 2
    %v844 = vadd.f32 %v842, %v843
    %v845 = vrot.slane %v844, 1
    %v846 = vadd.f32 %v844, %v845
    %v847 = vadd.f32 %v790, %v791
    %v848 = vadd.f32 %v847, %v792
    %v849 = vadd.f32 %v848, %v793
    %v850 = vrot.slane %v849, 4
    %v851 = vadd.f32 %v849, %v850
    %v852 = vrot.slane %v851, 2
    %v853 = vadd.f32 %v851, %v852
    %v854 = vrot.slane %v853, 1
    %v855 = vadd.f32 %v853, %v854
    %v856 = vadd.f32 %v794, %v795
    %v857 = vadd.f32 %v856, %v796
    %v858 = vadd.f32 %v857, %v797
    %v859 = vrot.slane %v858, 4
    %v860 = vadd.f32 %v858, %v859
    %v861 = vrot.slane %v860, 2
    %v862 = vadd.f32 %v860, %v861
    %v863 = vrot.slane %v862, 1
    %v864 = vadd.f32 %v862, %v863
    %v865 = vadd.f32 %v798, %v799
    %v866 = vadd.f32 %v865, %v800
    %v867 = vadd.f32 %v866, %v801
    %v868 = vrot.slane %v867, 4
    %v869 = vadd.f32 %v867, %v868
    %v870 = vrot.slane %v869, 2
    %v871 = vadd.f32 %v869, %v870
    %v872 = vrot.slane %v871, 1
    %v873 = vadd.f32 %v871, %v872
    %s874 = scalar_lea.vmem %s2, 192
    %v875 = vld [vmem:[%s874] sm:$0xff]
    %v876 = vld [vmem:[%s874 + $0x8] sm:$0xff]
    %v877 = vld [vmem:[%s874 + $0x10] sm:$0xff]
    %v878 = vld [vmem:[%s874 + $0x18] sm:$0xff]
    %880 = vset.pattern.permute.xlu0 0
    %881 = vperm.xlu0 %880, %v875
    %v882 = vpop.permute.xlu0 %881
    %885 = vset.pattern.permute.xlu0 0
    %886 = vperm.xlu0 %885, %v876
    %v887 = vpop.permute.xlu0 %886
    %890 = vset.pattern.permute.xlu0 0
    %891 = vperm.xlu0 %890, %v877
    %v892 = vpop.permute.xlu0 %891
    %895 = vset.pattern.permute.xlu0 0
    %896 = vperm.xlu0 %895, %v878
    %v897 = vpop.permute.xlu0 %896
    %v899 = vmul.f32 %v69, %v882
    %v900 = vmul.f32 %v70, %v887
    %v901 = vmul.f32 %v71, %v892
    %v902 = vmul.f32 %v72, %v897
    %v903 = vmul.f32 %v73, %v882
    %v904 = vmul.f32 %v74, %v887
    %v905 = vmul.f32 %v75, %v892
    %v906 = vmul.f32 %v76, %v897
    %v907 = vmul.f32 %v77, %v882
    %v908 = vmul.f32 %v78, %v887
    %v909 = vmul.f32 %v79, %v892
    %v910 = vmul.f32 %v80, %v897
    %v911 = vmul.f32 %v81, %v882
    %v912 = vmul.f32 %v82, %v887
    %v913 = vmul.f32 %v83, %v892
    %v914 = vmul.f32 %v84, %v897
    %v915 = vmul.f32 %v85, %v882
    %v916 = vmul.f32 %v86, %v887
    %v917 = vmul.f32 %v87, %v892
    %v918 = vmul.f32 %v88, %v897
    %v919 = vmul.f32 %v89, %v882
    %v920 = vmul.f32 %v90, %v887
    %v921 = vmul.f32 %v91, %v892
    %v922 = vmul.f32 %v92, %v897
    %v923 = vmul.f32 %v93, %v882
    %v924 = vmul.f32 %v94, %v887
    %v925 = vmul.f32 %v95, %v892
    %v926 = vmul.f32 %v96, %v897
    %v927 = vmul.f32 %v97, %v882
    %v928 = vmul.f32 %v98, %v887
    %v929 = vmul.f32 %v99, %v892
    %v930 = vmul.f32 %v100, %v897
    %v931 = vadd.f32 %v899, %v900
    %v932 = vadd.f32 %v931, %v901
    %v933 = vadd.f32 %v932, %v902
    %v934 = vrot.slane %v933, 4
    %v935 = vadd.f32 %v933, %v934
    %v936 = vrot.slane %v935, 2
    %v937 = vadd.f32 %v935, %v936
    %v938 = vrot.slane %v937, 1
    %v939 = vadd.f32 %v937, %v938
    %v940 = vadd.f32 %v903, %v904
    %v941 = vadd.f32 %v940, %v905
    %v942 = vadd.f32 %v941, %v906
    %v943 = vrot.slane %v942, 4
    %v944 = vadd.f32 %v942, %v943
    %v945 = vrot.slane %v944, 2
    %v946 = vadd.f32 %v944, %v945
    %v947 = vrot.slane %v946, 1
    %v948 = vadd.f32 %v946, %v947
    %v949 = vadd.f32 %v907, %v908
    %v950 = vadd.f32 %v949, %v909
    %v951 = vadd.f32 %v950, %v910
    %v952 = vrot.slane %v951, 4
    %v953 = vadd.f32 %v951, %v952
    %v954 = vrot.slane %v953, 2
    %v955 = vadd.f32 %v953, %v954
    %v956 = vrot.slane %v955, 1
    %v957 = vadd.f32 %v955, %v956
    %v958 = vadd.f32 %v911, %v912
    %v959 = vadd.f32 %v958, %v913
    %v960 = vadd.f32 %v959, %v914
    %v961 = vrot.slane %v960, 4
    %v962 = vadd.f32 %v960, %v961
    %v963 = vrot.slane %v962, 2
    %v964 = vadd.f32 %v962, %v963
    %v965 = vrot.slane %v964, 1
    %v966 = vadd.f32 %v964, %v965
    %v967 = vadd.f32 %v915, %v916
    %v968 = vadd.f32 %v967, %v917
    %v969 = vadd.f32 %v968, %v918
    %v970 = vrot.slane %v969, 4
    %v971 = vadd.f32 %v969, %v970
    %v972 = vrot.slane %v971, 2
    %v973 = vadd.f32 %v971, %v972
    %v974 = vrot.slane %v973, 1
    %v975 = vadd.f32 %v973, %v974
    %v976 = vadd.f32 %v919, %v920
    %v977 = vadd.f32 %v976, %v921
    %v978 = vadd.f32 %v977, %v922
    %v979 = vrot.slane %v978, 4
    %v980 = vadd.f32 %v978, %v979
    %v981 = vrot.slane %v980, 2
    %v982 = vadd.f32 %v980, %v981
    %v983 = vrot.slane %v982, 1
    %v984 = vadd.f32 %v982, %v983
    %v985 = vadd.f32 %v923, %v924
    %v986 = vadd.f32 %v985, %v925
    %v987 = vadd.f32 %v986, %v926
    %v988 = vrot.slane %v987, 4
    %v989 = vadd.f32 %v987, %v988
    %v990 = vrot.slane %v989, 2
    %v991 = vadd.f32 %v989, %v990
    %v992 = vrot.slane %v991, 1
    %v993 = vadd.f32 %v991, %v992
    %v994 = vadd.f32 %v927, %v928
    %v995 = vadd.f32 %v994, %v929
    %v996 = vadd.f32 %v995, %v930
    %v997 = vrot.slane %v996, 4
    %v998 = vadd.f32 %v996, %v997
    %v999 = vrot.slane %v998, 2
    %v1000 = vadd.f32 %v998, %v999
    %v1001 = vrot.slane %v1000, 1
    %v1002 = vadd.f32 %v1000, %v1001
    %v1003 = vld [vmem:[%s1] sm:$0xff]
    %vm1004 = vcmp.gt.f32.partialorder %v1003, 0.5
    %s1005 = sld [smem:[#allocation7]]
    %v1006 = vstv %s1005
    %v1007 = vadd.f32 %v165, %v1006
    %v1008 = vadd.f32 %v174, %v1006
    %v1009 = vadd.f32 %v183, %v1006
    %v1010 = vadd.f32 %v192, %v1006
    %v1011 = vadd.f32 %v201, %v1006
    %v1012 = vadd.f32 %v210, %v1006
    %v1013 = vadd.f32 %v219, %v1006
    %v1014 = vadd.f32 %v228, %v1006
    %vm1023 = vcmask 1041409
    %v1024 = vsel %vm1023, %v1008, %v1007
    %vm1025 = vcmask 1042434
    %v1026 = vsel %vm1025, %v1009, %v1024
    %vm1027 = vcmask 1043459
    %v1028 = vsel %vm1027, %v1010, %v1026
    %vm1029 = vcmask 1044484
    %v1030 = vsel %vm1029, %v1011, %v1028
    %vm1031 = vcmask 1045509
    %v1032 = vsel %vm1031, %v1012, %v1030
    %vm1033 = vcmask 1046534
    %v1034 = vsel %vm1033, %v1013, %v1032
    %vm1035 = vcmask 1047559
    %v1036 = vsel %vm1035, %v1014, %v1034
    %v1038 = vsel %vm1004, %v1036, -1e+12
    %v1039 = vrot.slane %v1038, 4
    %v1040 = vmax.f32 %v1038, %v1039
    %v1041 = vrot.slane %v1040, 2
    %v1042 = vmax.f32 %v1040, %v1041
    %v1043 = vrot.slane %v1042, 1
    %v1044 = vmax.f32 %v1042, %v1043
    %v1045 = vsub.f32 %v1038, %v1044
    %v1046 = vmul.f32 %v1045, 1.442695
    %v1047 = vpow.pop %v1046
    %v1048 = vrot.slane %v1047, 4
    %v1049 = vadd.f32 %v1047, %v1048
    %v1050 = vrot.slane %v1049, 2
    %v1051 = vadd.f32 %v1049, %v1050
    %v1052 = vrot.slane %v1051, 1
    %v1053 = vadd.f32 %v1051, %v1052
    %v1054 = vrcp.pop %v1053
    %v1055 = vmul.f32 %v1053, %v1054
    %v1056 = vsub.f32 2.0, %v1055
    %v1057 = vmul.f32 %v1054, %v1056
    %v1058 = vmul.f32 %v1047, %v1057
    %v1059 = vmul.f32 %v1058, %v1003
    %v1060 = vrot.slane %v1003, 4
    %v1061 = vadd.f32 %v1003, %v1060
    %v1062 = vrot.slane %v1061, 2
    %v1063 = vadd.f32 %v1061, %v1062
    %v1064 = vrot.slane %v1063, 1
    %v1065 = vadd.f32 %v1063, %v1064
    %v1074 = vsel %vm1023, %v561, %v552
    %v1075 = vsel %vm1025, %v570, %v1074
    %v1076 = vsel %vm1027, %v579, %v1075
    %v1077 = vsel %vm1029, %v588, %v1076
    %v1078 = vsel %vm1031, %v597, %v1077
    %v1079 = vsel %vm1033, %v606, %v1078
    %v1080 = vsel %vm1035, %v615, %v1079
    %v1082 = vmul.f32 %v1059, %v1080
    %v1083 = vrot.slane %v1082, 4
    %v1084 = vadd.f32 %v1082, %v1083
    %v1085 = vrot.slane %v1084, 2
    %v1086 = vadd.f32 %v1084, %v1085
    %v1087 = vrot.slane %v1086, 1
    %v1088 = vadd.f32 %v1086, %v1087
    %s1089 = sld [smem:[#allocation8]]
    %v1090 = vstv %s1089
    %v1091 = vadd.f32 %v1088, %v1090
    %vm1092 = vcmp.gt.f32.partialorder %v1065, 0.5
    %v1093 = vsel %vm1092, %v1091, -1e+12
    %v1094 = vsub.f32 %v1093, %v1093
    %v1095 = vmul.f32 %v1094, 1.442695
    %v1096 = vpow.pop %v1095
    %v1097 = vadd.f32 %v1096, 0.0
    %v1098 = vrcp.pop %v1097
    %v1099 = vmul.f32 %v1097, %v1098
    %v1100 = vsub.f32 2.0, %v1099
    %v1101 = vmul.f32 %v1098, %v1100
    %v1102 = vmul.f32 %v1096, %v1101
    %v1103 = vmul.f32 %v1102, %v1058
    %v1104 = vadd.f32 %v1103, 0.0
    %v1105 = vmul.f32 %v1103, %v1003
    %v1106 = vadd.f32 %v1105, 0.0
    %v1115 = vsel %vm1023, %v948, %v939
    %v1116 = vsel %vm1025, %v957, %v1115
    %v1117 = vsel %vm1027, %v966, %v1116
    %v1118 = vsel %vm1029, %v975, %v1117
    %v1119 = vsel %vm1031, %v984, %v1118
    %v1120 = vsel %vm1033, %v993, %v1119
    %v1121 = vsel %vm1035, %v1002, %v1120
    %v1123 = vmul.f32 %v1106, %v1121
    %v1124 = vrot.slane %v1123, 4
    %v1125 = vadd.f32 %v1123, %v1124
    %v1126 = vrot.slane %v1125, 2
    %v1127 = vadd.f32 %v1125, %v1126
    %v1128 = vrot.slane %v1127, 1
    %v1129 = vadd.f32 %v1127, %v1128
    %s1130 = sld [smem:[#allocation2]]
    %v1131 = vstv %s1130
    %v1132 = vadd.f32 %v1129, %v1131
    %s1133 = scalar_lea.vmem %s1, 8
    %v1134 = vld [vmem:[%s1133] sm:$0xff]
    %v1135 = vld [vmem:[%s1133 + $0x8] sm:$0xff]
    %v1136 = vld [vmem:[%s1133 + $0x10] sm:$0xff]
    %v1137 = vld [vmem:[%s1133 + $0x18] sm:$0xff]
    %v1138 = vld [vmem:[%s1133 + $0x20] sm:$0xff]
    %v1139 = vld [vmem:[%s1133 + $0x28] sm:$0xff]
    %vm1140 = vcmp.gt.f32.partialorder %v1134, 0.5
    %vm1141 = vcmp.gt.f32.partialorder %v1135, 0.5
    %vm1142 = vcmp.gt.f32.partialorder %v1136, 0.5
    %vm1143 = vcmp.gt.f32.partialorder %v1137, 0.5
    %vm1144 = vcmp.gt.f32.partialorder %v1138, 0.5
    %vm1145 = vcmp.gt.f32.partialorder %v1139, 0.5
    %s1146 = sld [smem:[#allocation7 + $0x1]]
    %v1147 = vstv %s1146
    %v1148 = vadd.f32 %v294, %v1147
    %v1149 = vadd.f32 %v303, %v1147
    %v1150 = vadd.f32 %v312, %v1147
    %v1151 = vadd.f32 %v321, %v1147
    %v1152 = vadd.f32 %v330, %v1147
    %v1153 = vadd.f32 %v339, %v1147
    %v1154 = vadd.f32 %v348, %v1147
    %v1155 = vadd.f32 %v357, %v1147
    %v1164 = vsel %vm1023, %v1149, %v1148
    %v1165 = vsel %vm1025, %v1150, %v1164
    %v1166 = vsel %vm1027, %v1151, %v1165
    %v1167 = vsel %vm1029, %v1152, %v1166
    %v1168 = vsel %vm1031, %v1153, %v1167
    %v1169 = vsel %vm1033, %v1154, %v1168
    %v1170 = vsel %vm1035, %v1155, %v1169
    %v1172 = vsel %vm1140, %v1170, -1e+12
    %v1173 = vsel %vm1141, %v1170, -1e+12
    %v1174 = vsel %vm1142, %v1170, -1e+12
    %v1175 = vsel %vm1143, %v1170, -1e+12
    %v1176 = vsel %vm1144, %v1170, -1e+12
    %v1177 = vsel %vm1145, %v1170, -1e+12
    %v1178 = vrot.slane %v1172, 4
    %v1179 = vmax.f32 %v1172, %v1178
    %v1180 = vrot.slane %v1179, 2
    %v1181 = vmax.f32 %v1179, %v1180
    %v1182 = vrot.slane %v1181, 1
    %v1183 = vmax.f32 %v1181, %v1182
    %v1184 = vrot.slane %v1173, 4
    %v1185 = vmax.f32 %v1173, %v1184
    %v1186 = vrot.slane %v1185, 2
    %v1187 = vmax.f32 %v1185, %v1186
    %v1188 = vrot.slane %v1187, 1
    %v1189 = vmax.f32 %v1187, %v1188
    %v1190 = vrot.slane %v1174, 4
    %v1191 = vmax.f32 %v1174, %v1190
    %v1192 = vrot.slane %v1191, 2
    %v1193 = vmax.f32 %v1191, %v1192
    %v1194 = vrot.slane %v1193, 1
    %v1195 = vmax.f32 %v1193, %v1194
    %v1196 = vrot.slane %v1175, 4
    %v1197 = vmax.f32 %v1175, %v1196
    %v1198 = vrot.slane %v1197, 2
    %v1199 = vmax.f32 %v1197, %v1198
    %v1200 = vrot.slane %v1199, 1
    %v1201 = vmax.f32 %v1199, %v1200
    %v1202 = vrot.slane %v1176, 4
    %v1203 = vmax.f32 %v1176, %v1202
    %v1204 = vrot.slane %v1203, 2
    %v1205 = vmax.f32 %v1203, %v1204
    %v1206 = vrot.slane %v1205, 1
    %v1207 = vmax.f32 %v1205, %v1206
    %v1208 = vrot.slane %v1177, 4
    %v1209 = vmax.f32 %v1177, %v1208
    %v1210 = vrot.slane %v1209, 2
    %v1211 = vmax.f32 %v1209, %v1210
    %v1212 = vrot.slane %v1211, 1
    %v1213 = vmax.f32 %v1211, %v1212
    %v1214 = vsub.f32 %v1172, %v1183
    %v1215 = vsub.f32 %v1173, %v1189
    %v1216 = vsub.f32 %v1174, %v1195
    %v1217 = vsub.f32 %v1175, %v1201
    %v1218 = vsub.f32 %v1176, %v1207
    %v1219 = vsub.f32 %v1177, %v1213
    %v1220 = vmul.f32 %v1214, 1.442695
    %v1221 = vpow.pop %v1220
    %v1222 = vmul.f32 %v1215, 1.442695
    %v1223 = vpow.pop %v1222
    %v1224 = vmul.f32 %v1216, 1.442695
    %v1225 = vpow.pop %v1224
    %v1226 = vmul.f32 %v1217, 1.442695
    %v1227 = vpow.pop %v1226
    %v1228 = vmul.f32 %v1218, 1.442695
    %v1229 = vpow.pop %v1228
    %v1230 = vmul.f32 %v1219, 1.442695
    %v1231 = vpow.pop %v1230
    %v1232 = vrot.slane %v1221, 4
    %v1233 = vadd.f32 %v1221, %v1232
    %v1234 = vrot.slane %v1233, 2
    %v1235 = vadd.f32 %v1233, %v1234
    %v1236 = vrot.slane %v1235, 1
    %v1237 = vadd.f32 %v1235, %v1236
    %v1238 = vrot.slane %v1223, 4
    %v1239 = vadd.f32 %v1223, %v1238
    %v1240 = vrot.slane %v1239, 2
    %v1241 = vadd.f32 %v1239, %v1240
    %v1242 = vrot.slane %v1241, 1
    %v1243 = vadd.f32 %v1241, %v1242
    %v1244 = vrot.slane %v1225, 4
    %v1245 = vadd.f32 %v1225, %v1244
    %v1246 = vrot.slane %v1245, 2
    %v1247 = vadd.f32 %v1245, %v1246
    %v1248 = vrot.slane %v1247, 1
    %v1249 = vadd.f32 %v1247, %v1248
    %v1250 = vrot.slane %v1227, 4
    %v1251 = vadd.f32 %v1227, %v1250
    %v1252 = vrot.slane %v1251, 2
    %v1253 = vadd.f32 %v1251, %v1252
    %v1254 = vrot.slane %v1253, 1
    %v1255 = vadd.f32 %v1253, %v1254
    %v1256 = vrot.slane %v1229, 4
    %v1257 = vadd.f32 %v1229, %v1256
    %v1258 = vrot.slane %v1257, 2
    %v1259 = vadd.f32 %v1257, %v1258
    %v1260 = vrot.slane %v1259, 1
    %v1261 = vadd.f32 %v1259, %v1260
    %v1262 = vrot.slane %v1231, 4
    %v1263 = vadd.f32 %v1231, %v1262
    %v1264 = vrot.slane %v1263, 2
    %v1265 = vadd.f32 %v1263, %v1264
    %v1266 = vrot.slane %v1265, 1
    %v1267 = vadd.f32 %v1265, %v1266
    %v1268 = vrcp.pop %v1237
    %v1269 = vrcp.pop %v1243
    %v1270 = vrcp.pop %v1249
    %v1271 = vrcp.pop %v1255
    %v1272 = vrcp.pop %v1261
    %v1273 = vrcp.pop %v1267
    %v1274 = vmul.f32 %v1237, %v1268
    %v1275 = vmul.f32 %v1243, %v1269
    %v1276 = vmul.f32 %v1249, %v1270
    %v1277 = vmul.f32 %v1255, %v1271
    %v1278 = vmul.f32 %v1261, %v1272
    %v1279 = vmul.f32 %v1267, %v1273
    %v1280 = vsub.f32 2.0, %v1274
    %v1281 = vsub.f32 2.0, %v1275
    %v1282 = vsub.f32 2.0, %v1276
    %v1283 = vsub.f32 2.0, %v1277
    %v1284 = vsub.f32 2.0, %v1278
    %v1285 = vsub.f32 2.0, %v1279
    %v1286 = vmul.f32 %v1268, %v1280
    %v1287 = vmul.f32 %v1269, %v1281
    %v1288 = vmul.f32 %v1270, %v1282
    %v1289 = vmul.f32 %v1271, %v1283
    %v1290 = vmul.f32 %v1272, %v1284
    %v1291 = vmul.f32 %v1273, %v1285
    %v1292 = vmul.f32 %v1221, %v1286
    %v1293 = vmul.f32 %v1223, %v1287
    %v1294 = vmul.f32 %v1225, %v1288
    %v1295 = vmul.f32 %v1227, %v1289
    %v1296 = vmul.f32 %v1229, %v1290
    %v1297 = vmul.f32 %v1231, %v1291
    %v1298 = vmul.f32 %v1292, %v1134
    %v1299 = vmul.f32 %v1293, %v1135
    %v1300 = vmul.f32 %v1294, %v1136
    %v1301 = vmul.f32 %v1295, %v1137
    %v1302 = vmul.f32 %v1296, %v1138
    %v1303 = vmul.f32 %v1297, %v1139
    %v1304 = vrot.slane %v1134, 4
    %v1305 = vadd.f32 %v1134, %v1304
    %v1306 = vrot.slane %v1305, 2
    %v1307 = vadd.f32 %v1305, %v1306
    %v1308 = vrot.slane %v1307, 1
    %v1309 = vadd.f32 %v1307, %v1308
    %v1310 = vrot.slane %v1135, 4
    %v1311 = vadd.f32 %v1135, %v1310
    %v1312 = vrot.slane %v1311, 2
    %v1313 = vadd.f32 %v1311, %v1312
    %v1314 = vrot.slane %v1313, 1
    %v1315 = vadd.f32 %v1313, %v1314
    %v1316 = vrot.slane %v1136, 4
    %v1317 = vadd.f32 %v1136, %v1316
    %v1318 = vrot.slane %v1317, 2
    %v1319 = vadd.f32 %v1317, %v1318
    %v1320 = vrot.slane %v1319, 1
    %v1321 = vadd.f32 %v1319, %v1320
    %v1322 = vrot.slane %v1137, 4
    %v1323 = vadd.f32 %v1137, %v1322
    %v1324 = vrot.slane %v1323, 2
    %v1325 = vadd.f32 %v1323, %v1324
    %v1326 = vrot.slane %v1325, 1
    %v1327 = vadd.f32 %v1325, %v1326
    %v1328 = vrot.slane %v1138, 4
    %v1329 = vadd.f32 %v1138, %v1328
    %v1330 = vrot.slane %v1329, 2
    %v1331 = vadd.f32 %v1329, %v1330
    %v1332 = vrot.slane %v1331, 1
    %v1333 = vadd.f32 %v1331, %v1332
    %v1334 = vrot.slane %v1139, 4
    %v1335 = vadd.f32 %v1139, %v1334
    %v1336 = vrot.slane %v1335, 2
    %v1337 = vadd.f32 %v1335, %v1336
    %v1338 = vrot.slane %v1337, 1
    %v1339 = vadd.f32 %v1337, %v1338
    %v1348 = vsel %vm1023, %v690, %v681
    %v1349 = vsel %vm1025, %v699, %v1348
    %v1350 = vsel %vm1027, %v708, %v1349
    %v1351 = vsel %vm1029, %v717, %v1350
    %v1352 = vsel %vm1031, %v726, %v1351
    %v1353 = vsel %vm1033, %v735, %v1352
    %v1354 = vsel %vm1035, %v744, %v1353
    %v1356 = vmul.f32 %v1298, %v1354
    %v1357 = vmul.f32 %v1299, %v1354
    %v1358 = vmul.f32 %v1300, %v1354
    %v1359 = vmul.f32 %v1301, %v1354
    %v1360 = vmul.f32 %v1302, %v1354
    %v1361 = vmul.f32 %v1303, %v1354
    %v1362 = vrot.slane %v1356, 4
    %v1363 = vadd.f32 %v1356, %v1362
    %v1364 = vrot.slane %v1363, 2
    %v1365 = vadd.f32 %v1363, %v1364
    %v1366 = vrot.slane %v1365, 1
    %v1367 = vadd.f32 %v1365, %v1366
    %v1368 = vrot.slane %v1357, 4
    %v1369 = vadd.f32 %v1357, %v1368
    %v1370 = vrot.slane %v1369, 2
    %v1371 = vadd.f32 %v1369, %v1370
    %v1372 = vrot.slane %v1371, 1
    %v1373 = vadd.f32 %v1371, %v1372
    %v1374 = vrot.slane %v1358, 4
    %v1375 = vadd.f32 %v1358, %v1374
    %v1376 = vrot.slane %v1375, 2
    %v1377 = vadd.f32 %v1375, %v1376
    %v1378 = vrot.slane %v1377, 1
    %v1379 = vadd.f32 %v1377, %v1378
    %v1380 = vrot.slane %v1359, 4
    %v1381 = vadd.f32 %v1359, %v1380
    %v1382 = vrot.slane %v1381, 2
    %v1383 = vadd.f32 %v1381, %v1382
    %v1384 = vrot.slane %v1383, 1
    %v1385 = vadd.f32 %v1383, %v1384
    %v1386 = vrot.slane %v1360, 4
    %v1387 = vadd.f32 %v1360, %v1386
    %v1388 = vrot.slane %v1387, 2
    %v1389 = vadd.f32 %v1387, %v1388
    %v1390 = vrot.slane %v1389, 1
    %v1391 = vadd.f32 %v1389, %v1390
    %v1392 = vrot.slane %v1361, 4
    %v1393 = vadd.f32 %v1361, %v1392
    %v1394 = vrot.slane %v1393, 2
    %v1395 = vadd.f32 %v1393, %v1394
    %v1396 = vrot.slane %v1395, 1
    %v1397 = vadd.f32 %v1395, %v1396
    %s1398 = sld [smem:[#allocation8 + $0x1]]
    %v1399 = vstv %s1398
    %v1400 = vadd.f32 %v1367, %v1399
    %v1401 = vadd.f32 %v1373, %v1399
    %v1402 = vadd.f32 %v1379, %v1399
    %v1403 = vadd.f32 %v1385, %v1399
    %v1404 = vadd.f32 %v1391, %v1399
    %v1405 = vadd.f32 %v1397, %v1399
    %vm1406 = vcmp.gt.f32.partialorder %v1309, 0.5
    %vm1407 = vcmp.gt.f32.partialorder %v1315, 0.5
    %vm1408 = vcmp.gt.f32.partialorder %v1321, 0.5
    %vm1409 = vcmp.gt.f32.partialorder %v1327, 0.5
    %vm1410 = vcmp.gt.f32.partialorder %v1333, 0.5
    %vm1411 = vcmp.gt.f32.partialorder %v1339, 0.5
    %v1412 = vsel %vm1406, %v1400, -1e+12
    %v1413 = vsel %vm1407, %v1401, -1e+12
    %v1414 = vsel %vm1408, %v1402, -1e+12
    %v1415 = vsel %vm1409, %v1403, -1e+12
    %v1416 = vsel %vm1410, %v1404, -1e+12
    %v1417 = vsel %vm1411, %v1405, -1e+12
    %v1418 = vmax.f32 %v1412, %v1416
    %v1419 = vmax.f32 %v1413, %v1417
    %v1420 = vmax.f32 %v1418, %v1419
    %v1421 = vmax.f32 %v1414, %v1415
    %v1422 = vmax.f32 %v1420, %v1421
    %v1423 = vsub.f32 %v1412, %v1422
    %v1424 = vsub.f32 %v1413, %v1422
    %v1425 = vsub.f32 %v1414, %v1422
    %v1426 = vsub.f32 %v1415, %v1422
    %v1427 = vsub.f32 %v1416, %v1422
    %v1428 = vsub.f32 %v1417, %v1422
    %v1429 = vmul.f32 %v1423, 1.442695
    %v1430 = vpow.pop %v1429
    %v1431 = vmul.f32 %v1424, 1.442695
    %v1432 = vpow.pop %v1431
    %v1433 = vmul.f32 %v1425, 1.442695
    %v1434 = vpow.pop %v1433
    %v1435 = vmul.f32 %v1426, 1.442695
    %v1436 = vpow.pop %v1435
    %v1437 = vmul.f32 %v1427, 1.442695
    %v1438 = vpow.pop %v1437
    %v1439 = vmul.f32 %v1428, 1.442695
    %v1440 = vpow.pop %v1439
    %v1441 = vadd.f32 %v1430, %v1432
    %v1442 = vadd.f32 %v1441, %v1434
    %v1443 = vadd.f32 %v1442, %v1436
    %v1444 = vadd.f32 %v1443, %v1438
    %v1445 = vadd.f32 %v1444, %v1440
    %v1446 = vrcp.pop %v1445
    %v1447 = vmul.f32 %v1445, %v1446
    %v1448 = vsub.f32 2.0, %v1447
    %v1449 = vmul.f32 %v1446, %v1448
    %v1450 = vmul.f32 %v1430, %v1449
    %v1451 = vmul.f32 %v1432, %v1449
    %v1452 = vmul.f32 %v1434, %v1449
    %v1453 = vmul.f32 %v1436, %v1449
    %v1454 = vmul.f32 %v1438, %v1449
    %v1455 = vmul.f32 %v1440, %v1449
    %v1456 = vmul.f32 %v1450, %v1292
    %v1457 = vmul.f32 %v1451, %v1293
    %v1458 = vmul.f32 %v1452, %v1294
    %v1459 = vmul.f32 %v1453, %v1295
    %v1460 = vmul.f32 %v1454, %v1296
    %v1461 = vmul.f32 %v1455, %v1297
    %v1462 = vadd.f32 %v1456, %v1457
    %v1463 = vadd.f32 %v1462, %v1458
    %v1464 = vadd.f32 %v1463, %v1459
    %v1465 = vadd.f32 %v1464, %v1460
    %v1466 = vadd.f32 %v1465, %v1461
    %v1467 = vmul.f32 %v1456, %v1134
    %v1468 = vmul.f32 %v1457, %v1135
    %v1469 = vmul.f32 %v1458, %v1136
    %v1470 = vmul.f32 %v1459, %v1137
    %v1471 = vmul.f32 %v1460, %v1138
    %v1472 = vmul.f32 %v1461, %v1139
    %v1473 = vadd.f32 %v1467, %v1468
    %v1474 = vadd.f32 %v1473, %v1469
    %v1475 = vadd.f32 %v1474, %v1470
    %v1476 = vadd.f32 %v1475, %v1471
    %v1477 = vadd.f32 %v1476, %v1472
    %v1478 = vmul.f32 %v1477, %v1121
    %v1479 = vrot.slane %v1478, 4
    %v1480 = vadd.f32 %v1478, %v1479
    %v1481 = vrot.slane %v1480, 2
    %v1482 = vadd.f32 %v1480, %v1481
    %v1483 = vrot.slane %v1482, 1
    %v1484 = vadd.f32 %v1482, %v1483
    %v1485 = vadd.f32 %v1484, %v1131
    %s1486 = scalar_lea.vmem %s1, 56
    %v1487 = vld [vmem:[%s1486] sm:$0xff]
    %v1488 = vld [vmem:[%s1486 + $0x8] sm:$0xff]
    %v1489 = vld [vmem:[%s1486 + $0x10] sm:$0xff]
    %v1490 = vld [vmem:[%s1486 + $0x18] sm:$0xff]
    %v1491 = vld [vmem:[%s1486 + $0x20] sm:$0xff]
    %v1492 = vld [vmem:[%s1486 + $0x28] sm:$0xff]
    %v1493 = vld [vmem:[%s1486 + $0x30] sm:$0xff]
    %v1494 = vld [vmem:[%s1486 + $0x38] sm:$0xff]
    %v1495 = vld [vmem:[%s1486 + $0x40] sm:$0xff]
    %v1496 = vld [vmem:[%s1486 + $0x48] sm:$0xff]
    %vm1497 = vcmp.gt.f32.partialorder %v1487, 0.5
    %vm1498 = vcmp.gt.f32.partialorder %v1488, 0.5
    %vm1499 = vcmp.gt.f32.partialorder %v1489, 0.5
    %vm1500 = vcmp.gt.f32.partialorder %v1490, 0.5
    %vm1501 = vcmp.gt.f32.partialorder %v1491, 0.5
    %vm1502 = vcmp.gt.f32.partialorder %v1492, 0.5
    %vm1503 = vcmp.gt.f32.partialorder %v1493, 0.5
    %vm1504 = vcmp.gt.f32.partialorder %v1494, 0.5
    %vm1505 = vcmp.gt.f32.partialorder %v1495, 0.5
    %vm1506 = vcmp.gt.f32.partialorder %v1496, 0.5
    %s1507 = sld [smem:[#allocation7 + $0x2]]
    %v1508 = vstv %s1507
    %v1509 = vadd.f32 %v423, %v1508
    %v1510 = vadd.f32 %v432, %v1508
    %v1511 = vadd.f32 %v441, %v1508
    %v1512 = vadd.f32 %v450, %v1508
    %v1513 = vadd.f32 %v459, %v1508
    %v1514 = vadd.f32 %v468, %v1508
    %v1515 = vadd.f32 %v477, %v1508
    %v1516 = vadd.f32 %v486, %v1508
    %v1525 = vsel %vm1023, %v1510, %v1509
    %v1526 = vsel %vm1025, %v1511, %v1525
    %v1527 = vsel %vm1027, %v1512, %v1526
    %v1528 = vsel %vm1029, %v1513, %v1527
    %v1529 = vsel %vm1031, %v1514, %v1528
    %v1530 = vsel %vm1033, %v1515, %v1529
    %v1531 = vsel %vm1035, %v1516, %v1530
    %v1533 = vsel %vm1497, %v1531, -1e+12
    %v1534 = vsel %vm1498, %v1531, -1e+12
    %v1535 = vsel %vm1499, %v1531, -1e+12
    %v1536 = vsel %vm1500, %v1531, -1e+12
    %v1537 = vsel %vm1501, %v1531, -1e+12
    %v1538 = vsel %vm1502, %v1531, -1e+12
    %v1539 = vsel %vm1503, %v1531, -1e+12
    %v1540 = vsel %vm1504, %v1531, -1e+12
    %v1541 = vsel %vm1505, %v1531, -1e+12
    %v1542 = vsel %vm1506, %v1531, -1e+12
    %v1543 = vrot.slane %v1533, 4
    %v1544 = vmax.f32 %v1533, %v1543
    %v1545 = vrot.slane %v1544, 2
    %v1546 = vmax.f32 %v1544, %v1545
    %v1547 = vrot.slane %v1546, 1
    %v1548 = vmax.f32 %v1546, %v1547
    %v1549 = vrot.slane %v1534, 4
    %v1550 = vmax.f32 %v1534, %v1549
    %v1551 = vrot.slane %v1550, 2
    %v1552 = vmax.f32 %v1550, %v1551
    %v1553 = vrot.slane %v1552, 1
    %v1554 = vmax.f32 %v1552, %v1553
    %v1555 = vrot.slane %v1535, 4
    %v1556 = vmax.f32 %v1535, %v1555
    %v1557 = vrot.slane %v1556, 2
    %v1558 = vmax.f32 %v1556, %v1557
    %v1559 = vrot.slane %v1558, 1
    %v1560 = vmax.f32 %v1558, %v1559
    %v1561 = vrot.slane %v1536, 4
    %v1562 = vmax.f32 %v1536, %v1561
    %v1563 = vrot.slane %v1562, 2
    %v1564 = vmax.f32 %v1562, %v1563
    %v1565 = vrot.slane %v1564, 1
    %v1566 = vmax.f32 %v1564, %v1565
    %v1567 = vrot.slane %v1537, 4
    %v1568 = vmax.f32 %v1537, %v1567
    %v1569 = vrot.slane %v1568, 2
    %v1570 = vmax.f32 %v1568, %v1569
    %v1571 = vrot.slane %v1570, 1
    %v1572 = vmax.f32 %v1570, %v1571
    %v1573 = vrot.slane %v1538, 4
    %v1574 = vmax.f32 %v1538, %v1573
    %v1575 = vrot.slane %v1574, 2
    %v1576 = vmax.f32 %v1574, %v1575
    %v1577 = vrot.slane %v1576, 1
    %v1578 = vmax.f32 %v1576, %v1577
    %v1579 = vrot.slane %v1539, 4
    %v1580 = vmax.f32 %v1539, %v1579
    %v1581 = vrot.slane %v1580, 2
    %v1582 = vmax.f32 %v1580, %v1581
    %v1583 = vrot.slane %v1582, 1
    %v1584 = vmax.f32 %v1582, %v1583
    %v1585 = vrot.slane %v1540, 4
    %v1586 = vmax.f32 %v1540, %v1585
    %v1587 = vrot.slane %v1586, 2
    %v1588 = vmax.f32 %v1586, %v1587
    %v1589 = vrot.slane %v1588, 1
    %v1590 = vmax.f32 %v1588, %v1589
    %v1591 = vrot.slane %v1541, 4
    %v1592 = vmax.f32 %v1541, %v1591
    %v1593 = vrot.slane %v1592, 2
    %v1594 = vmax.f32 %v1592, %v1593
    %v1595 = vrot.slane %v1594, 1
    %v1596 = vmax.f32 %v1594, %v1595
    %v1597 = vrot.slane %v1542, 4
    %v1598 = vmax.f32 %v1542, %v1597
    %v1599 = vrot.slane %v1598, 2
    %v1600 = vmax.f32 %v1598, %v1599
    %v1601 = vrot.slane %v1600, 1
    %v1602 = vmax.f32 %v1600, %v1601
    %v1603 = vsub.f32 %v1533, %v1548
    %v1604 = vsub.f32 %v1534, %v1554
    %v1605 = vsub.f32 %v1535, %v1560
    %v1606 = vsub.f32 %v1536, %v1566
    %v1607 = vsub.f32 %v1537, %v1572
    %v1608 = vsub.f32 %v1538, %v1578
    %v1609 = vsub.f32 %v1539, %v1584
    %v1610 = vsub.f32 %v1540, %v1590
    %v1611 = vsub.f32 %v1541, %v1596
    %v1612 = vsub.f32 %v1542, %v1602
    %v1613 = vmul.f32 %v1603, 1.442695
    %v1614 = vpow.pop %v1613
    %v1615 = vmul.f32 %v1604, 1.442695
    %v1616 = vpow.pop %v1615
    %v1617 = vmul.f32 %v1605, 1.442695
    %v1618 = vpow.pop %v1617
    %v1619 = vmul.f32 %v1606, 1.442695
    %v1620 = vpow.pop %v1619
    %v1621 = vmul.f32 %v1607, 1.442695
    %v1622 = vpow.pop %v1621
    %v1623 = vmul.f32 %v1608, 1.442695
    %v1624 = vpow.pop %v1623
    %v1625 = vmul.f32 %v1609, 1.442695
    %v1626 = vpow.pop %v1625
    %v1627 = vmul.f32 %v1610, 1.442695
    %v1628 = vpow.pop %v1627
    %v1629 = vmul.f32 %v1611, 1.442695
    %v1630 = vpow.pop %v1629
    %v1631 = vmul.f32 %v1612, 1.442695
    %v1632 = vpow.pop %v1631
    %v1633 = vrot.slane %v1614, 4
    %v1634 = vadd.f32 %v1614, %v1633
    %v1635 = vrot.slane %v1634, 2
    %v1636 = vadd.f32 %v1634, %v1635
    %v1637 = vrot.slane %v1636, 1
    %v1638 = vadd.f32 %v1636, %v1637
    %v1639 = vrot.slane %v1616, 4
    %v1640 = vadd.f32 %v1616, %v1639
    %v1641 = vrot.slane %v1640, 2
    %v1642 = vadd.f32 %v1640, %v1641
    %v1643 = vrot.slane %v1642, 1
    %v1644 = vadd.f32 %v1642, %v1643
    %v1645 = vrot.slane %v1618, 4
    %v1646 = vadd.f32 %v1618, %v1645
    %v1647 = vrot.slane %v1646, 2
    %v1648 = vadd.f32 %v1646, %v1647
    %v1649 = vrot.slane %v1648, 1
    %v1650 = vadd.f32 %v1648, %v1649
    %v1651 = vrot.slane %v1620, 4
    %v1652 = vadd.f32 %v1620, %v1651
    %v1653 = vrot.slane %v1652, 2
    %v1654 = vadd.f32 %v1652, %v1653
    %v1655 = vrot.slane %v1654, 1
    %v1656 = vadd.f32 %v1654, %v1655
    %v1657 = vrot.slane %v1622, 4
    %v1658 = vadd.f32 %v1622, %v1657
    %v1659 = vrot.slane %v1658, 2
    %v1660 = vadd.f32 %v1658, %v1659
    %v1661 = vrot.slane %v1660, 1
    %v1662 = vadd.f32 %v1660, %v1661
    %v1663 = vrot.slane %v1624, 4
    %v1664 = vadd.f32 %v1624, %v1663
    %v1665 = vrot.slane %v1664, 2
    %v1666 = vadd.f32 %v1664, %v1665
    %v1667 = vrot.slane %v1666, 1
    %v1668 = vadd.f32 %v1666, %v1667
    %v1669 = vrot.slane %v1626, 4
    %v1670 = vadd.f32 %v1626, %v1669
    %v1671 = vrot.slane %v1670, 2
    %v1672 = vadd.f32 %v1670, %v1671
    %v1673 = vrot.slane %v1672, 1
    %v1674 = vadd.f32 %v1672, %v1673
    %v1675 = vrot.slane %v1628, 4
    %v1676 = vadd.f32 %v1628, %v1675
    %v1677 = vrot.slane %v1676, 2
    %v1678 = vadd.f32 %v1676, %v1677
    %v1679 = vrot.slane %v1678, 1
    %v1680 = vadd.f32 %v1678, %v1679
    %v1681 = vrot.slane %v1630, 4
    %v1682 = vadd.f32 %v1630, %v1681
    %v1683 = vrot.slane %v1682, 2
    %v1684 = vadd.f32 %v1682, %v1683
    %v1685 = vrot.slane %v1684, 1
    %v1686 = vadd.f32 %v1684, %v1685
    %v1687 = vrot.slane %v1632, 4
    %v1688 = vadd.f32 %v1632, %v1687
    %v1689 = vrot.slane %v1688, 2
    %v1690 = vadd.f32 %v1688, %v1689
    %v1691 = vrot.slane %v1690, 1
    %v1692 = vadd.f32 %v1690, %v1691
    %v1693 = vrcp.pop %v1638
    %v1694 = vrcp.pop %v1644
    %v1695 = vrcp.pop %v1650
    %v1696 = vrcp.pop %v1656
    %v1697 = vrcp.pop %v1662
    %v1698 = vrcp.pop %v1668
    %v1699 = vrcp.pop %v1674
    %v1700 = vrcp.pop %v1680
    %v1701 = vrcp.pop %v1686
    %v1702 = vrcp.pop %v1692
    %v1703 = vmul.f32 %v1638, %v1693
    %v1704 = vmul.f32 %v1644, %v1694
    %v1705 = vmul.f32 %v1650, %v1695
    %v1706 = vmul.f32 %v1656, %v1696
    %v1707 = vmul.f32 %v1662, %v1697
    %v1708 = vmul.f32 %v1668, %v1698
    %v1709 = vmul.f32 %v1674, %v1699
    %v1710 = vmul.f32 %v1680, %v1700
    %v1711 = vmul.f32 %v1686, %v1701
    %v1712 = vmul.f32 %v1692, %v1702
    %v1713 = vsub.f32 2.0, %v1703
    %v1714 = vsub.f32 2.0, %v1704
    %v1715 = vsub.f32 2.0, %v1705
    %v1716 = vsub.f32 2.0, %v1706
    %v1717 = vsub.f32 2.0, %v1707
    %v1718 = vsub.f32 2.0, %v1708
    %v1719 = vsub.f32 2.0, %v1709
    %v1720 = vsub.f32 2.0, %v1710
    %v1721 = vsub.f32 2.0, %v1711
    %v1722 = vsub.f32 2.0, %v1712
    %v1723 = vmul.f32 %v1693, %v1713
    %v1724 = vmul.f32 %v1694, %v1714
    %v1725 = vmul.f32 %v1695, %v1715
    %v1726 = vmul.f32 %v1696, %v1716
    %v1727 = vmul.f32 %v1697, %v1717
    %v1728 = vmul.f32 %v1698, %v1718
    %v1729 = vmul.f32 %v1699, %v1719
    %v1730 = vmul.f32 %v1700, %v1720
    %v1731 = vmul.f32 %v1701, %v1721
    %v1732 = vmul.f32 %v1702, %v1722
    %v1733 = vmul.f32 %v1614, %v1723
    %v1734 = vmul.f32 %v1616, %v1724
    %v1735 = vmul.f32 %v1618, %v1725
    %v1736 = vmul.f32 %v1620, %v1726
    %v1737 = vmul.f32 %v1622, %v1727
    %v1738 = vmul.f32 %v1624, %v1728
    %v1739 = vmul.f32 %v1626, %v1729
    %v1740 = vmul.f32 %v1628, %v1730
    %v1741 = vmul.f32 %v1630, %v1731
    %v1742 = vmul.f32 %v1632, %v1732
    %v1743 = vmul.f32 %v1733, %v1487
    %v1744 = vmul.f32 %v1734, %v1488
    %v1745 = vmul.f32 %v1735, %v1489
    %v1746 = vmul.f32 %v1736, %v1490
    %v1747 = vmul.f32 %v1737, %v1491
    %v1748 = vmul.f32 %v1738, %v1492
    %v1749 = vmul.f32 %v1739, %v1493
    %v1750 = vmul.f32 %v1740, %v1494
    %v1751 = vmul.f32 %v1741, %v1495
    %v1752 = vmul.f32 %v1742, %v1496
    %v1753 = vrot.slane %v1487, 4
    %v1754 = vadd.f32 %v1487, %v1753
    %v1755 = vrot.slane %v1754, 2
    %v1756 = vadd.f32 %v1754, %v1755
    %v1757 = vrot.slane %v1756, 1
    %v1758 = vadd.f32 %v1756, %v1757
    %v1759 = vrot.slane %v1488, 4
    %v1760 = vadd.f32 %v1488, %v1759
    %v1761 = vrot.slane %v1760, 2
    %v1762 = vadd.f32 %v1760, %v1761
    %v1763 = vrot.slane %v1762, 1
    %v1764 = vadd.f32 %v1762, %v1763
    %v1765 = vrot.slane %v1489, 4
    %v1766 = vadd.f32 %v1489, %v1765
    %v1767 = vrot.slane %v1766, 2
    %v1768 = vadd.f32 %v1766, %v1767
    %v1769 = vrot.slane %v1768, 1
    %v1770 = vadd.f32 %v1768, %v1769
    %v1771 = vrot.slane %v1490, 4
    %v1772 = vadd.f32 %v1490, %v1771
    %v1773 = vrot.slane %v1772, 2
    %v1774 = vadd.f32 %v1772, %v1773
    %v1775 = vrot.slane %v1774, 1
    %v1776 = vadd.f32 %v1774, %v1775
    %v1777 = vrot.slane %v1491, 4
    %v1778 = vadd.f32 %v1491, %v1777
    %v1779 = vrot.slane %v1778, 2
    %v1780 = vadd.f32 %v1778, %v1779
    %v1781 = vrot.slane %v1780, 1
    %v1782 = vadd.f32 %v1780, %v1781
    %v1783 = vrot.slane %v1492, 4
    %v1784 = vadd.f32 %v1492, %v1783
    %v1785 = vrot.slane %v1784, 2
    %v1786 = vadd.f32 %v1784, %v1785
    %v1787 = vrot.slane %v1786, 1
    %v1788 = vadd.f32 %v1786, %v1787
    %v1789 = vrot.slane %v1493, 4
    %v1790 = vadd.f32 %v1493, %v1789
    %v1791 = vrot.slane %v1790, 2
    %v1792 = vadd.f32 %v1790, %v1791
    %v1793 = vrot.slane %v1792, 1
    %v1794 = vadd.f32 %v1792, %v1793
    %v1795 = vrot.slane %v1494, 4
    %v1796 = vadd.f32 %v1494, %v1795
    %v1797 = vrot.slane %v1796, 2
    %v1798 = vadd.f32 %v1796, %v1797
    %v1799 = vrot.slane %v1798, 1
    %v1800 = vadd.f32 %v1798, %v1799
    %v1801 = vrot.slane %v1495, 4
    %v1802 = vadd.f32 %v1495, %v1801
    %v1803 = vrot.slane %v1802, 2
    %v1804 = vadd.f32 %v1802, %v1803
    %v1805 = vrot.slane %v1804, 1
    %v1806 = vadd.f32 %v1804, %v1805
    %v1807 = vrot.slane %v1496, 4
    %v1808 = vadd.f32 %v1496, %v1807
    %v1809 = vrot.slane %v1808, 2
    %v1810 = vadd.f32 %v1808, %v1809
    %v1811 = vrot.slane %v1810, 1
    %v1812 = vadd.f32 %v1810, %v1811
    %v1821 = vsel %vm1023, %v819, %v810
    %v1822 = vsel %vm1025, %v828, %v1821
    %v1823 = vsel %vm1027, %v837, %v1822
    %v1824 = vsel %vm1029, %v846, %v1823
    %v1825 = vsel %vm1031, %v855, %v1824
    %v1826 = vsel %vm1033, %v864, %v1825
    %v1827 = vsel %vm1035, %v873, %v1826
    %v1829 = vmul.f32 %v1743, %v1827
    %v1830 = vmul.f32 %v1744, %v1827
    %v1831 = vmul.f32 %v1745, %v1827
    %v1832 = vmul.f32 %v1746, %v1827
    %v1833 = vmul.f32 %v1747, %v1827
    %v1834 = vmul.f32 %v1748, %v1827
    %v1835 = vmul.f32 %v1749, %v1827
    %v1836 = vmul.f32 %v1750, %v1827
    %v1837 = vmul.f32 %v1751, %v1827
    %v1838 = vmul.f32 %v1752, %v1827
    %v1839 = vrot.slane %v1829, 4
    %v1840 = vadd.f32 %v1829, %v1839
    %v1841 = vrot.slane %v1840, 2
    %v1842 = vadd.f32 %v1840, %v1841
    %v1843 = vrot.slane %v1842, 1
    %v1844 = vadd.f32 %v1842, %v1843
    %v1845 = vrot.slane %v1830, 4
    %v1846 = vadd.f32 %v1830, %v1845
    %v1847 = vrot.slane %v1846, 2
    %v1848 = vadd.f32 %v1846, %v1847
    %v1849 = vrot.slane %v1848, 1
    %v1850 = vadd.f32 %v1848, %v1849
    %v1851 = vrot.slane %v1831, 4
    %v1852 = vadd.f32 %v1831, %v1851
    %v1853 = vrot.slane %v1852, 2
    %v1854 = vadd.f32 %v1852, %v1853
    %v1855 = vrot.slane %v1854, 1
    %v1856 = vadd.f32 %v1854, %v1855
    %v1857 = vrot.slane %v1832, 4
    %v1858 = vadd.f32 %v1832, %v1857
    %v1859 = vrot.slane %v1858, 2
    %v1860 = vadd.f32 %v1858, %v1859
    %v1861 = vrot.slane %v1860, 1
    %v1862 = vadd.f32 %v1860, %v1861
    %v1863 = vrot.slane %v1833, 4
    %v1864 = vadd.f32 %v1833, %v1863
    %v1865 = vrot.slane %v1864, 2
    %v1866 = vadd.f32 %v1864, %v1865
    %v1867 = vrot.slane %v1866, 1
    %v1868 = vadd.f32 %v1866, %v1867
    %v1869 = vrot.slane %v1834, 4
    %v1870 = vadd.f32 %v1834, %v1869
    %v1871 = vrot.slane %v1870, 2
    %v1872 = vadd.f32 %v1870, %v1871
    %v1873 = vrot.slane %v1872, 1
    %v1874 = vadd.f32 %v1872, %v1873
    %v1875 = vrot.slane %v1835, 4
    %v1876 = vadd.f32 %v1835, %v1875
    %v1877 = vrot.slane %v1876, 2
    %v1878 = vadd.f32 %v1876, %v1877
    %v1879 = vrot.slane %v1878, 1
    %v1880 = vadd.f32 %v1878, %v1879
    %v1881 = vrot.slane %v1836, 4
    %v1882 = vadd.f32 %v1836, %v1881
    %v1883 = vrot.slane %v1882, 2
    %v1884 = vadd.f32 %v1882, %v1883
    %v1885 = vrot.slane %v1884, 1
    %v1886 = vadd.f32 %v1884, %v1885
    %v1887 = vrot.slane %v1837, 4
    %v1888 = vadd.f32 %v1837, %v1887
    %v1889 = vrot.slane %v1888, 2
    %v1890 = vadd.f32 %v1888, %v1889
    %v1891 = vrot.slane %v1890, 1
    %v1892 = vadd.f32 %v1890, %v1891
    %v1893 = vrot.slane %v1838, 4
    %v1894 = vadd.f32 %v1838, %v1893
    %v1895 = vrot.slane %v1894, 2
    %v1896 = vadd.f32 %v1894, %v1895
    %v1897 = vrot.slane %v1896, 1
    %v1898 = vadd.f32 %v1896, %v1897
    %s1899 = sld [smem:[#allocation8 + $0x2]]
    %v1900 = vstv %s1899
    %v1901 = vadd.f32 %v1844, %v1900
    %v1902 = vadd.f32 %v1850, %v1900
    %v1903 = vadd.f32 %v1856, %v1900
    %v1904 = vadd.f32 %v1862, %v1900
    %v1905 = vadd.f32 %v1868, %v1900
    %v1906 = vadd.f32 %v1874, %v1900
    %v1907 = vadd.f32 %v1880, %v1900
    %v1908 = vadd.f32 %v1886, %v1900
    %v1909 = vadd.f32 %v1892, %v1900
    %v1910 = vadd.f32 %v1898, %v1900
    %vm1911 = vcmp.gt.f32.partialorder %v1758, 0.5
    %vm1912 = vcmp.gt.f32.partialorder %v1764, 0.5
    %vm1913 = vcmp.gt.f32.partialorder %v1770, 0.5
    %vm1914 = vcmp.gt.f32.partialorder %v1776, 0.5
    %vm1915 = vcmp.gt.f32.partialorder %v1782, 0.5
    %vm1916 = vcmp.gt.f32.partialorder %v1788, 0.5
    %vm1917 = vcmp.gt.f32.partialorder %v1794, 0.5
    %vm1918 = vcmp.gt.f32.partialorder %v1800, 0.5
    %vm1919 = vcmp.gt.f32.partialorder %v1806, 0.5
    %vm1920 = vcmp.gt.f32.partialorder %v1812, 0.5
    %v1921 = vsel %vm1911, %v1901, -1e+12
    %v1922 = vsel %vm1912, %v1902, -1e+12
    %v1923 = vsel %vm1913, %v1903, -1e+12
    %v1924 = vsel %vm1914, %v1904, -1e+12
    %v1925 = vsel %vm1915, %v1905, -1e+12
    %v1926 = vsel %vm1916, %v1906, -1e+12
    %v1927 = vsel %vm1917, %v1907, -1e+12
    %v1928 = vsel %vm1918, %v1908, -1e+12
    %v1929 = vsel %vm1919, %v1909, -1e+12
    %v1930 = vsel %vm1920, %v1910, -1e+12
    %v1931 = vmax.f32 %v1921, %v1925
    %v1932 = vmax.f32 %v1922, %v1926
    %v1933 = vmax.f32 %v1923, %v1927
    %v1934 = vmax.f32 %v1924, %v1928
    %v1935 = vmax.f32 %v1931, %v1929
    %v1936 = vmax.f32 %v1932, %v1930
    %v1937 = vmax.f32 %v1935, %v1936
    %v1938 = vmax.f32 %v1933, %v1934
    %v1939 = vmax.f32 %v1937, %v1938
    %v1940 = vsub.f32 %v1921, %v1939
    %v1941 = vsub.f32 %v1922, %v1939
    %v1942 = vsub.f32 %v1923, %v1939
    %v1943 = vsub.f32 %v1924, %v1939
    %v1944 = vsub.f32 %v1925, %v1939
    %v1945 = vsub.f32 %v1926, %v1939
    %v1946 = vsub.f32 %v1927, %v1939
    %v1947 = vsub.f32 %v1928, %v1939
    %v1948 = vsub.f32 %v1929, %v1939
    %v1949 = vsub.f32 %v1930, %v1939
    %v1950 = vmul.f32 %v1940, 1.442695
    %v1951 = vpow.pop %v1950
    %v1952 = vmul.f32 %v1941, 1.442695
    %v1953 = vpow.pop %v1952
    %v1954 = vmul.f32 %v1942, 1.442695
    %v1955 = vpow.pop %v1954
    %v1956 = vmul.f32 %v1943, 1.442695
    %v1957 = vpow.pop %v1956
    %v1958 = vmul.f32 %v1944, 1.442695
    %v1959 = vpow.pop %v1958
    %v1960 = vmul.f32 %v1945, 1.442695
    %v1961 = vpow.pop %v1960
    %v1962 = vmul.f32 %v1946, 1.442695
    %v1963 = vpow.pop %v1962
    %v1964 = vmul.f32 %v1947, 1.442695
    %v1965 = vpow.pop %v1964
    %v1966 = vmul.f32 %v1948, 1.442695
    %v1967 = vpow.pop %v1966
    %v1968 = vmul.f32 %v1949, 1.442695
    %v1969 = vpow.pop %v1968
    %v1970 = vadd.f32 %v1951, %v1953
    %v1971 = vadd.f32 %v1970, %v1955
    %v1972 = vadd.f32 %v1971, %v1957
    %v1973 = vadd.f32 %v1972, %v1959
    %v1974 = vadd.f32 %v1973, %v1961
    %v1975 = vadd.f32 %v1974, %v1963
    %v1976 = vadd.f32 %v1975, %v1965
    %v1977 = vadd.f32 %v1976, %v1967
    %v1978 = vadd.f32 %v1977, %v1969
    %v1979 = vrcp.pop %v1978
    %v1980 = vmul.f32 %v1978, %v1979
    %v1981 = vsub.f32 2.0, %v1980
    %v1982 = vmul.f32 %v1979, %v1981
    %v1983 = vmul.f32 %v1951, %v1982
    %v1984 = vmul.f32 %v1953, %v1982
    %v1985 = vmul.f32 %v1955, %v1982
    %v1986 = vmul.f32 %v1957, %v1982
    %v1987 = vmul.f32 %v1959, %v1982
    %v1988 = vmul.f32 %v1961, %v1982
    %v1989 = vmul.f32 %v1963, %v1982
    %v1990 = vmul.f32 %v1965, %v1982
    %v1991 = vmul.f32 %v1967, %v1982
    %v1992 = vmul.f32 %v1969, %v1982
    %v1993 = vmul.f32 %v1983, %v1733
    %v1994 = vmul.f32 %v1984, %v1734
    %v1995 = vmul.f32 %v1985, %v1735
    %v1996 = vmul.f32 %v1986, %v1736
    %v1997 = vmul.f32 %v1987, %v1737
    %v1998 = vmul.f32 %v1988, %v1738
    %v1999 = vmul.f32 %v1989, %v1739
    %v2000 = vmul.f32 %v1990, %v1740
    %v2001 = vmul.f32 %v1991, %v1741
    %v2002 = vmul.f32 %v1992, %v1742
    %v2003 = vadd.f32 %v1993, %v1994
    %v2004 = vadd.f32 %v2003, %v1995
    %v2005 = vadd.f32 %v2004, %v1996
    %v2006 = vadd.f32 %v2005, %v1997
    %v2007 = vadd.f32 %v2006, %v1998
    %v2008 = vadd.f32 %v2007, %v1999
    %v2009 = vadd.f32 %v2008, %v2000
    %v2010 = vadd.f32 %v2009, %v2001
    %v2011 = vadd.f32 %v2010, %v2002
    %v2012 = vmul.f32 %v1993, %v1487
    %v2013 = vmul.f32 %v1994, %v1488
    %v2014 = vmul.f32 %v1995, %v1489
    %v2015 = vmul.f32 %v1996, %v1490
    %v2016 = vmul.f32 %v1997, %v1491
    %v2017 = vmul.f32 %v1998, %v1492
    %v2018 = vmul.f32 %v1999, %v1493
    %v2019 = vmul.f32 %v2000, %v1494
    %v2020 = vmul.f32 %v2001, %v1495
    %v2021 = vmul.f32 %v2002, %v1496
    %v2022 = vadd.f32 %v2012, %v2013
    %v2023 = vadd.f32 %v2022, %v2014
    %v2024 = vadd.f32 %v2023, %v2015
    %v2025 = vadd.f32 %v2024, %v2016
    %v2026 = vadd.f32 %v2025, %v2017
    %v2027 = vadd.f32 %v2026, %v2018
    %v2028 = vadd.f32 %v2027, %v2019
    %v2029 = vadd.f32 %v2028, %v2020
    %v2030 = vadd.f32 %v2029, %v2021
    %v2031 = vmul.f32 %v2030, %v1121
    %v2032 = vrot.slane %v2031, 4
    %v2033 = vadd.f32 %v2031, %v2032
    %v2034 = vrot.slane %v2033, 2
    %v2035 = vadd.f32 %v2033, %v2034
    %v2036 = vrot.slane %v2035, 1
    %v2037 = vadd.f32 %v2035, %v2036
    %v2038 = vadd.f32 %v2037, %v1131
    %v2039 = vmax.f32 %v1132, %v1485
    %v2040 = vmax.f32 %v2039, %v2038
    %v2041 = vsub.f32 %v1132, %v2040
    %v2042 = vmul.f32 %v2041, 1.442695
    %v2043 = vpow.pop %v2042
    %v2044 = vsub.f32 %v1485, %v2040
    %v2045 = vmul.f32 %v2044, 1.442695
    %v2046 = vpow.pop %v2045
    %v2047 = vsub.f32 %v2038, %v2040
    %v2048 = vmul.f32 %v2047, 1.442695
    %v2049 = vpow.pop %v2048
    %v2050 = vadd.f32 %v2043, %v2046
    %v2051 = vadd.f32 %v2050, %v2049
    %v2052 = vrcp.pop %v2051
    %v2053 = vmul.f32 %v2051, %v2052
    %v2054 = vsub.f32 2.0, %v2053
    %v2055 = vmul.f32 %v2052, %v2054
    %v2056 = vmul.f32 %v2043, %v2055
    %v2057 = vmul.f32 %v2046, %v2055
    %v2058 = vmul.f32 %v2049, %v2055
    %v2059 = vmul.f32 %v2056, %v1106
    %v2060 = vmul.f32 %v2057, %v1477
    %v2061 = vmul.f32 %v2058, %v2030
    %v2062 = vadd.f32 %v2059, %v2060
    %v2063 = vadd.f32 %v2062, %v2061
    %v2064 = vmul.f32 %v2056, %v1104
    %v2065 = vmul.f32 %v2057, %v1466
    %v2066 = vmul.f32 %v2058, %v2011
    %v2067 = vadd.f32 %v2064, %v2065
    %v2068 = vadd.f32 %v2067, %v2066
    %v2070 = vrot.slane %v2063, 1
    %v2071 = vrot.slane %v2063, 2
    %v2072 = vrot.slane %v2063, 3
    %v2073 = vrot.slane %v2063, 4
    %v2074 = vrot.slane %v2063, 5
    %v2075 = vrot.slane %v2063, 6
    %v2076 = vrot.slane %v2063, 7
    %v2077 = vperm.slane %v2063, 0
    %v2078 = vperm.slane %v2070, 0
    %v2079 = vperm.slane %v2071, 0
    %v2080 = vperm.slane %v2072, 0
    %v2081 = vperm.slane %v2073, 0
    %v2082 = vperm.slane %v2074, 0
    %v2083 = vperm.slane %v2075, 0
    %v2084 = vperm.slane %v2076, 0
    %v2093 = vmul.f32 %v2077, %v69
    %v2094 = vmul.f32 %v2077, %v70
    %v2095 = vmul.f32 %v2077, %v71
    %v2096 = vmul.f32 %v2077, %v72
    %v2097 = vmul.f32 %v2078, %v73
    %v2098 = vmul.f32 %v2078, %v74
    %v2099 = vmul.f32 %v2078, %v75
    %v2100 = vmul.f32 %v2078, %v76
    %v2101 = vmul.f32 %v2079, %v77
    %v2102 = vmul.f32 %v2079, %v78
    %v2103 = vmul.f32 %v2079, %v79
    %v2104 = vmul.f32 %v2079, %v80
    %v2105 = vmul.f32 %v2080, %v81
    %v2106 = vmul.f32 %v2080, %v82
    %v2107 = vmul.f32 %v2080, %v83
    %v2108 = vmul.f32 %v2080, %v84
    %v2109 = vmul.f32 %v2081, %v85
    %v2110 = vmul.f32 %v2081, %v86
    %v2111 = vmul.f32 %v2081, %v87
    %v2112 = vmul.f32 %v2081, %v88
    %v2113 = vmul.f32 %v2082, %v89
    %v2114 = vmul.f32 %v2082, %v90
    %v2115 = vmul.f32 %v2082, %v91
    %v2116 = vmul.f32 %v2082, %v92
    %v2117 = vmul.f32 %v2083, %v93
    %v2118 = vmul.f32 %v2083, %v94
    %v2119 = vmul.f32 %v2083, %v95
    %v2120 = vmul.f32 %v2083, %v96
    %v2121 = vmul.f32 %v2084, %v97
    %v2122 = vmul.f32 %v2084, %v98
    %v2123 = vmul.f32 %v2084, %v99
    %v2124 = vmul.f32 %v2084, %v100
    %v2125 = vadd.f32 %v2093, %v2097
    %v2126 = vadd.f32 %v2125, %v2101
    %v2127 = vadd.f32 %v2126, %v2105
    %v2128 = vadd.f32 %v2127, %v2109
    %v2129 = vadd.f32 %v2128, %v2113
    %v2130 = vadd.f32 %v2129, %v2117
    %v2131 = vadd.f32 %v2130, %v2121
    %v2132 = vadd.f32 %v2094, %v2098
    %v2133 = vadd.f32 %v2132, %v2102
    %v2134 = vadd.f32 %v2133, %v2106
    %v2135 = vadd.f32 %v2134, %v2110
    %v2136 = vadd.f32 %v2135, %v2114
    %v2137 = vadd.f32 %v2136, %v2118
    %v2138 = vadd.f32 %v2137, %v2122
    %v2139 = vadd.f32 %v2095, %v2099
    %v2140 = vadd.f32 %v2139, %v2103
    %v2141 = vadd.f32 %v2140, %v2107
    %v2142 = vadd.f32 %v2141, %v2111
    %v2143 = vadd.f32 %v2142, %v2115
    %v2144 = vadd.f32 %v2143, %v2119
    %v2145 = vadd.f32 %v2144, %v2123
    %v2146 = vadd.f32 %v2096, %v2100
    %v2147 = vadd.f32 %v2146, %v2104
    %v2148 = vadd.f32 %v2147, %v2108
    %v2149 = vadd.f32 %v2148, %v2112
    %v2150 = vadd.f32 %v2149, %v2116
    %v2151 = vadd.f32 %v2150, %v2120
    %v2152 = vadd.f32 %v2151, %v2124
    %2153 = vst [vmem:[#allocation10] sm:$0xff] %v2131
    %2154 = vst [vmem:[#allocation10 + $0x8] sm:$0xff] %v2138
    %2155 = vst [vmem:[#allocation10 + $0x10] sm:$0xff] %v2145
    %2156 = vst [vmem:[#allocation10 + $0x18] sm:$0xff] %v2152
    %2157 = vst [vmem:[#allocation11] sm:$0xff] %v2068
    // Predicated region
    $region38: #{tpu_custom_call.1} parent=1 // pred_check
      _
    $region39: #{tpu_custom_call.1} parent=1 // pred_check_branch
      %2159 = sbr.rel (0) target = $region41
    $region40: #{tpu_custom_call.1} parent=1 // pred_region
      %2161 = vsyncadd [#allocation5], 0
      %s2162 = sshll.u32 [#allocation10], 4
      %s2163 = int_to_ptr.vmem [resolvable:$true] %s2162
      %s2164 = sshll.u32 %s6, 4
      %s2165 = int_to_ptr.hbm [resolvable:$true] %s2164
      %2170 = dma.vmem_to_hbm [thread:$0]  %s2163, 512, %s2165, [#allocation5], 128, 128, 8
    $region41: #{tpu_custom_call.1} parent=1 // pred_fallthru
      _
    // Predicated region
    $region42: #{tpu_custom_call.1} parent=1 // pred_check
      _
    $region43: #{tpu_custom_call.1} parent=1 // pred_check_branch
      %2172 = sbr.rel (0) target = $region45
    $region44: #{tpu_custom_call.1} parent=1 // pred_region
      %2174 = vsyncadd [#allocation12], 0
      %s2176 = sshll.u32 [#allocation11], 4
      %s2177 = int_to_ptr.vmem [resolvable:$true] %s2176
      %s2178 = sshll.u32 %s7, 4
      %s2179 = int_to_ptr.hbm [resolvable:$true] %s2178
      %2181 = dma.vmem_to_hbm [thread:$0]  %s2177, 128, %s2179, [#allocation12]
    $region45: #{tpu_custom_call.1} parent=1 // pred_fallthru
      _
    // Predicated region
    $region46: #{tpu_custom_call.1} parent=1 // pred_check
      _
    $region47: #{tpu_custom_call.1} parent=1 // pred_check_branch
      %2183 = sbr.rel (0) target = $region49
    $region48: #{tpu_custom_call.1} parent=1 // pred_region
      %2185 = dma.done [#allocation5], 512
    $region49: #{tpu_custom_call.1} parent=1 // pred_fallthru
      _
    // Predicated region
    $region50: #{tpu_custom_call.1} parent=1 // pred_check
      _
    $region51: #{tpu_custom_call.1} parent=1 // pred_check_branch
      %2187 = sbr.rel (0) target = $region53
    $region52: #{tpu_custom_call.1} parent=1 // pred_region
      %2189 = dma.done [#allocation12], 128
    $region53: #{tpu_custom_call.1} parent=1 // pred_fallthru
      _
    %2190 = vsyncpa [#allocation4], 1
    %2191 = vsyncpa [#allocation5], 1
    %2192 = vsyncpa [#allocation12], 1
    %2193 = vsyncpa [#allocation6], 1
    %2194 = vsyncpa [#allocation9], 1

</llo_original>
